<compile_context>
chip_gen: v7x
topology: tpu7x:2x2x1
jax: 0.10.0
libtpu: 0.0.40
codegen_flags: <defaults>
</compile_context>

<pallas_src>
import jax
import jax.numpy as jnp
from jax import lax
from jax.experimental import pallas as pl
from jax.experimental.pallas import tpu as pltpu

BN_EPS = 1e-5
_H1, _H2, _H3 = 128, 64, 32
_DEFAULT_MAX_TILE = 2048  # multiple of 128; sweep 2048-8192 for large-B serving


# --------------------------------------------------------------------------
# Kernel
# --------------------------------------------------------------------------
def _sigmoid(z):
    # sigmoid(z) == 0.5*tanh(z/2) + 0.5 : one EUP op instead of exp + divide.
    return 0.5 * jnp.tanh(0.5 * z) + 0.5


def _gated_epilogue(z, width):
    # z = [fc(bn-folded) | gate | proj] stacked on the sublane axis, f32,
    # feature-major (batch on lanes).  Dropout = identity (eval mode).
    z_fc = z[:width]
    z_gate = z[width:2 * width]
    z_res = z[2 * width:]
    return jnp.maximum(z_fc, 0.0) * _sigmoid(z_gate) + z_res


def hybrid_mlp_kernel(
    x_ref,            # (bt, input_dim) f32, batch-major (HBM layout, no transpose)
    w1_ref, b1_ref,   # (384, input_dim) bf16, (384, 1) f32  = [fc1(bn)|gate1|proj1]
    w2_ref, b2_ref,   # (192, 128)       bf16, (192, 1) f32  = [fc2(bn)|gate2|proj2]
    w3_ref, b3_ref,   # (96, 64)         bf16, (96, 1)  f32  = [fc3(bn)|gate3|proj3]
    wo_ref, bo_ref,   # (1, 32)          bf16, (1, 1)   f32
    out_ref,          # (1, bt) f32 — lane-dense output slab
):
    # Layer 1: contract the feature axis of the batch-major x tile directly
    # ((384,in) x (bt,in) -> (384,bt)); output lands feature-major for the rest.
    x_bf = x_ref[...].astype(jnp.bfloat16)
    z1 = lax.dot_general(
        w1_ref[...], x_bf, (((1,), (1,)), ((), ())),
        preferred_element_type=jnp.float32) + b1_ref[...]
    h = _gated_epilogue(z1, _H1)                                    # (128, bt) f32

    z2 = jnp.dot(w2_ref[...], h.astype(jnp.bfloat16),
                 preferred_element_type=jnp.float32) + b2_ref[...]
    h = _gated_epilogue(z2, _H2)                                    # (64, bt) f32

    z3 = jnp.dot(w3_ref[...], h.astype(jnp.bfloat16),
                 preferred_element_type=jnp.float32) + b3_ref[...]
    h = _gated_epilogue(z3, _H3)                                    # (32, bt) f32

    y = jnp.dot(wo_ref[...], h.astype(jnp.bfloat16),
                preferred_element_type=jnp.float32) + bo_ref[...]   # (1, bt)
    out_ref[...] = y.astype(out_ref.dtype)


# --------------------------------------------------------------------------
# Parameter fusion (BN folding + fc/gate/proj concat + bf16 cast), done once
# --------------------------------------------------------------------------
def _fold_bn(w, b, gamma, beta, mean, var, eps=BN_EPS):
    # bn(z) = z * scale + shift  with  scale = gamma / sqrt(var + eps)
    scale = gamma / jnp.sqrt(var + eps)
    shift = beta - mean * scale
    return w * scale[:, None], b * scale + shift


def _fuse_params(p, *, matmul_dtype=jnp.bfloat16):
    w1f, b1f = _fold_bn(p["fc1_w"], p["fc1_b"], p["bn1_gamma"], p["bn1_beta"],
                        p["bn1_mean"], p["bn1_var"])
    w2f, b2f = _fold_bn(p["fc2_w"], p["fc2_b"], p["bn2_gamma"], p["bn2_beta"],
                        p["bn2_mean"], p["bn2_var"])
    w3f, b3f = _fold_bn(p["fc3_w"], p["fc3_b"], p["bn3_gamma"], p["bn3_beta"],
                        p["bn3_mean"], p["bn3_var"])

    w1 = jnp.concatenate([w1f, p["gate1_w"], p["proj1_w"]], 0).astype(matmul_dtype)
    b1 = jnp.concatenate([b1f, p["gate1_b"], p["proj1_b"]])[:, None].astype(jnp.float32)
    w2 = jnp.concatenate([w2f, p["gate2_w"], p["proj2_w"]], 0).astype(matmul_dtype)
    b2 = jnp.concatenate([b2f, p["gate2_b"], p["proj2_b"]])[:, None].astype(jnp.float32)
    w3 = jnp.concatenate([w3f, p["gate3_w"], p["proj3_w"]], 0).astype(matmul_dtype)
    b3 = jnp.concatenate([b3f, p["gate3_b"], p["proj3_b"]])[:, None].astype(jnp.float32)
    wo = p["out_delay_w"].astype(matmul_dtype)
    bo = p["out_delay_b"][:, None].astype(jnp.float32)
    return (w1, b1, w2, b2, w3, b3, wo, bo)


# --------------------------------------------------------------------------
# Tile / VMEM sizing helpers
# --------------------------------------------------------------------------
def _round_up(x, m):
    return ((x + m - 1) // m) * m


def _pick_batch_tile(batch, max_tile=_DEFAULT_MAX_TILE):
    """Multiple of 128; prefer >=2 grid steps so both v7x TCs get work."""
    b128 = _round_up(batch, 128)
    if b128 <= 2 * max_tile:
        if b128 >= 256:
            return _round_up(b128 // 2, 128)
        return b128
    return max_tile


def _vmem_limit_bytes(batch_tile, input_dim):
    """Over-estimate of per-step VMEM; return None if default scoped limit is fine."""
    f32_rows = 3 * _H1 + _H1 + 3 * _H2 + _H2 + 3 * _H3 + _H3          # 896
    est = f32_rows * batch_tile * 4                                    # f32 slabs
    est += (_H1 + _H2 + _H3) * batch_tile * 2                          # bf16 h copies
    est += 2 * batch_tile * (input_dim * 4 + 2 * input_dim + 4)        # x tiles + out
    weight_elems = 3 * _H1 * input_dim + 3 * _H2 * _H1 + 3 * _H3 * _H2 + _H3
    est += 4 * weight_elems                                            # bf16, 2 buffers
    est += 2 << 20                                                     # headroom
    if est <= 12 * 1024 * 1024:
        return None       # fits under every chip's default scoped limit (v5e = 16 MiB)
    return min(est, 64 * 1024 * 1024)   # v7x physical VMEM per TensorCore


# --------------------------------------------------------------------------
# Wrapper
# --------------------------------------------------------------------------
def delay_predictor_forward(x, params, *, batch_tile=None,
                            matmul_dtype=jnp.bfloat16):
    """x: [B, input_dim] float32 -> [B, 1] float32 (eval-mode forward)."""
    B, input_dim = x.shape
    fused = _fuse_params(params, matmul_dtype=matmul_dtype)

    if batch_tile is None:
        batch_tile = _pick_batch_tile(B)
    num_tiles = pl.cdiv(B, batch_tile)
    b_pad = num_tiles * batch_tile
    if b_pad != B:
        # Cheap: pads a few narrow rows of x; no extra transpose pass over HBM.
        x = jnp.pad(x, ((0, b_pad - B), (0, 0)))

    in_specs = [pl.BlockSpec((batch_tile, input_dim), lambda i: (i, 0))]
    # Weights/biases are small and grid-invariant: constant-index full blocks
    # (the pipeline does not re-fetch a block whose index does not change).
    in_specs += [pl.BlockSpec(arr.shape, lambda i: (0, 0)) for arr in fused]

    out = pl.pallas_call(
        hybrid_mlp_kernel,
        out_shape=jax.ShapeDtypeStruct((1, b_pad), jnp.float32),
        grid_spec=pltpu.PrefetchScalarGridSpec(
            num_scalar_prefetch=0,
            grid=(num_tiles,),
            in_specs=in_specs,
            out_specs=pl.BlockSpec((1, batch_tile), lambda i: (0, i)),
        ),
        compiler_params=pltpu.CompilerParams(
            dimension_semantics=("parallel",),   # shard batch tiles across v7x TCs
            vmem_limit_bytes=_vmem_limit_bytes(batch_tile, input_dim),
        ),
    )(x, *fused)

    return out[0, :B][:, None]


# --------------------------------------------------------------------------
# Deterministic synthetic init matching the PyTorch module's shapes
# (nn.Linear weight is [out, in]; kept in that convention since the kernel
#  computes W @ h with the batch on lanes.)
# --------------------------------------------------------------------------
def init_params(key, input_dim):
    linear_specs = {
        "proj1": (input_dim, 128), "proj2": (128, 64), "proj3": (64, 32),
        "fc1": (input_dim, 128), "gate1": (input_dim, 128),
        "fc2": (128, 64), "gate2": (128, 64),
        "fc3": (64, 32), "gate3": (64, 32),
        "out_delay": (32, 1),
    }
    bn_dims = {"bn1": 128, "bn2": 64, "bn3": 32}

    n_keys = 2 * len(linear_specs) + 4 * len(bn_dims)
    keys = iter(jax.random.split(key, n_keys))
    params = {}
    for name, (din, dout) in linear_specs.items():
        bound = float(din) ** -0.5  # PyTorch default uniform bound
        params[name + "_w"] = jax.random.uniform(
            next(keys), (dout, din), jnp.float32, minval=-bound, maxval=bound)
        params[name + "_b"] = jax.random.uniform(
            next(keys), (dout,), jnp.float32, minval=-bound, maxval=bound)
    for name, d in bn_dims.items():
        params[name + "_gamma"] = jax.random.uniform(
            next(keys), (d,), jnp.float32, minval=0.8, maxval=1.2)
        params[name + "_beta"] = jax.random.uniform(
            next(keys), (d,), jnp.float32, minval=-0.1, maxval=0.1)
        params[name + "_mean"] = 0.1 * jax.random.normal(next(keys), (d,), jnp.float32)
        params[name + "_var"] = jax.random.uniform(
            next(keys), (d,), jnp.float32, minval=0.5, maxval=1.5)
    return params


# --------------------------------------------------------------------------
# Pure-JAX reference (eval mode: dropout identity, BN uses running stats)
# --------------------------------------------------------------------------
def reference_forward(x, p, eps=BN_EPS):
    def lin(h, name):
        return h @ p[name + "_w"].T + p[name + "_b"]

    def bn(z, name):
        return ((z - p[name + "_mean"]) / jnp.sqrt(p[name + "_var"] + eps)
                * p[name + "_gamma"] + p[name + "_beta"])

    h = x
    res = lin(h, "proj1")
    h = jnp.maximum(bn(lin(h, "fc1"), "bn1"), 0.0) * jax.nn.sigmoid(lin(h, "gate1")) + res
    res = lin(h, "proj2")
    h = jnp.maximum(bn(lin(h, "fc2"), "bn2"), 0.0) * jax.nn.sigmoid(lin(h, "gate2")) + res
    res = lin(h, "proj3")
    h = jnp.maximum(bn(lin(h, "fc3"), "bn3"), 0.0) * jax.nn.sigmoid(lin(h, "gate3")) + res
    return lin(h, "out_delay")


if __name__ == "__main__":
    key = jax.random.PRNGKey(0)
    k_x, k_p = jax.random.split(key)

    input_dim = 12
    batch = 512          # adaptive tile picker -> 2 grid steps of 256

    x = jax.random.normal(k_x, (batch, input_dim), dtype=jnp.float32)
    params = init_params(k_p, input_dim)

    out = delay_predictor_forward(x, params)
    out = jax.block_until_ready(out)

    ref = reference_forward(x, params)
    assert out.shape == (batch, 1)
    max_err = float(jnp.max(jnp.abs(out - ref)))
    # bf16 MXU operands -> tolerance is looser than the pure-f32 path.
    assert jnp.allclose(out, ref, atol=5e-2, rtol=5e-2), max_err

    print("KERNEL_OK")
</pallas_src>

<mosaic_0001>
module attributes {stable_mosaic.version = 11 : i64} {
  func.func @hybrid_mlp_kernel(%arg0: i32, %arg1: memref<256x12xf32, #tpu.memory_space<vmem>>, %arg2: memref<384x12xbf16, #tpu.memory_space<vmem>>, %arg3: memref<384x1xf32, #tpu.memory_space<vmem>>, %arg4: memref<192x128xbf16, #tpu.memory_space<vmem>>, %arg5: memref<192x1xf32, #tpu.memory_space<vmem>>, %arg6: memref<96x64xbf16, #tpu.memory_space<vmem>>, %arg7: memref<96x1xf32, #tpu.memory_space<vmem>>, %arg8: memref<1x32xbf16, #tpu.memory_space<vmem>>, %arg9: memref<1x1xf32, #tpu.memory_space<vmem>>, %arg10: memref<1x256xf32, #tpu.memory_space<vmem>>) attributes {dimension_semantics = [#tpu.dimension_semantics<parallel>], iteration_bounds = array<i64: 2>, scalar_prefetch = 0 : i64, scratch_operands = 0 : i64, tpu.core_type = #tpu.core_type<tc>, window_params = [{transform_indices = @transform_0, window_bounds = array<i64: 256, 12>}, {pipeline_mode = #tpu.pipeline_mode<synchronous>, transform_indices = @transform_1, window_bounds = array<i64: 384, 12>}, {pipeline_mode = #tpu.pipeline_mode<synchronous>, transform_indices = @transform_2, window_bounds = array<i64: 384, 1>}, {pipeline_mode = #tpu.pipeline_mode<synchronous>, transform_indices = @transform_3, window_bounds = array<i64: 192, 128>}, {pipeline_mode = #tpu.pipeline_mode<synchronous>, transform_indices = @transform_4, window_bounds = array<i64: 192, 1>}, {pipeline_mode = #tpu.pipeline_mode<synchronous>, transform_indices = @transform_5, window_bounds = array<i64: 96, 64>}, {pipeline_mode = #tpu.pipeline_mode<synchronous>, transform_indices = @transform_6, window_bounds = array<i64: 96, 1>}, {pipeline_mode = #tpu.pipeline_mode<synchronous>, transform_indices = @transform_7, window_bounds = array<i64: 1, 32>}, {pipeline_mode = #tpu.pipeline_mode<synchronous>, transform_indices = @transform_8, window_bounds = array<i64: 1, 1>}, {transform_indices = @transform_9, window_bounds = array<i64: 1, 256>}]} {
    %c0 = arith.constant 0 : index
    %c0_0 = arith.constant 0 : index
    %0 = vector.load %arg1[%c0, %c0_0] : memref<256x12xf32, #tpu.memory_space<vmem>>, vector<256x12xf32>
    %1 = arith.truncf %0 : vector<256x12xf32> to vector<256x12xbf16>
    %c0_1 = arith.constant 0 : index
    %c0_2 = arith.constant 0 : index
    %2 = vector.load %arg2[%c0_1, %c0_2] : memref<384x12xbf16, #tpu.memory_space<vmem>>, vector<384x12xbf16>
    %cst = arith.constant dense<0.000000e+00> : vector<384x256xf32>
    %3 = tpu.matmul %2, %1, %cst {dimension_numbers = #tpu.dot_dimension_numbers<[1], [1], [0], [0], [0, 0, 1, 0], [], []>} : vector<384x12xbf16>, vector<256x12xbf16>, vector<384x256xf32> -> vector<384x256xf32>
    %c0_3 = arith.constant 0 : index
    %c0_4 = arith.constant 0 : index
    %4 = vector.load %arg3[%c0_3, %c0_4] : memref<384x1xf32, #tpu.memory_space<vmem>>, vector<384x1xf32>
    %5 = vector.broadcast %4 : vector<384x1xf32> to vector<384x256xf32>
    %6 = arith.addf %3, %5 : vector<384x256xf32>
    %7 = vector.extract_strided_slice %6 {offsets = [0, 0], sizes = [128, 256], strides = [1, 1]} : vector<384x256xf32> to vector<128x256xf32>
    %8 = vector.extract_strided_slice %6 {offsets = [128, 0], sizes = [128, 256], strides = [1, 1]} : vector<384x256xf32> to vector<128x256xf32>
    %9 = vector.extract_strided_slice %6 {offsets = [256, 0], sizes = [128, 256], strides = [1, 1]} : vector<384x256xf32> to vector<128x256xf32>
    %cst_5 = arith.constant 0.000000e+00 : f32
    %10 = vector.broadcast %cst_5 : f32 to vector<128x256xf32>
    %11 = arith.maximumf %7, %10 : vector<128x256xf32>
    %cst_6 = arith.constant 5.000000e-01 : f32
    %12 = vector.broadcast %cst_6 : f32 to vector<128x256xf32>
    %13 = arith.mulf %12, %8 : vector<128x256xf32>
    %14 = math.tanh %13 : vector<128x256xf32>
    %cst_7 = arith.constant 5.000000e-01 : f32
    %15 = vector.broadcast %cst_7 : f32 to vector<128x256xf32>
    %16 = arith.mulf %15, %14 : vector<128x256xf32>
    %cst_8 = arith.constant 5.000000e-01 : f32
    %17 = vector.broadcast %cst_8 : f32 to vector<128x256xf32>
    %18 = arith.addf %16, %17 : vector<128x256xf32>
    %19 = arith.mulf %11, %18 : vector<128x256xf32>
    %20 = arith.addf %19, %9 : vector<128x256xf32>
    %c0_9 = arith.constant 0 : index
    %c0_10 = arith.constant 0 : index
    %21 = vector.load %arg4[%c0_9, %c0_10] : memref<192x128xbf16, #tpu.memory_space<vmem>>, vector<192x128xbf16>
    %22 = arith.truncf %20 : vector<128x256xf32> to vector<128x256xbf16>
    %cst_11 = arith.constant dense<0.000000e+00> : vector<192x256xf32>
    %23 = tpu.matmul %21, %22, %cst_11 {dimension_numbers = #tpu.dot_dimension_numbers<[1], [0], [0], [1], [0, 0, 1, 1], [], []>} : vector<192x128xbf16>, vector<128x256xbf16>, vector<192x256xf32> -> vector<192x256xf32>
    %c0_12 = arith.constant 0 : index
    %c0_13 = arith.constant 0 : index
    %24 = vector.load %arg5[%c0_12, %c0_13] : memref<192x1xf32, #tpu.memory_space<vmem>>, vector<192x1xf32>
    %25 = vector.broadcast %24 : vector<192x1xf32> to vector<192x256xf32>
    %26 = arith.addf %23, %25 : vector<192x256xf32>
    %27 = vector.extract_strided_slice %26 {offsets = [0, 0], sizes = [64, 256], strides = [1, 1]} : vector<192x256xf32> to vector<64x256xf32>
    %28 = vector.extract_strided_slice %26 {offsets = [64, 0], sizes = [64, 256], strides = [1, 1]} : vector<192x256xf32> to vector<64x256xf32>
    %29 = vector.extract_strided_slice %26 {offsets = [128, 0], sizes = [64, 256], strides = [1, 1]} : vector<192x256xf32> to vector<64x256xf32>
    %cst_14 = arith.constant 0.000000e+00 : f32
    %30 = vector.broadcast %cst_14 : f32 to vector<64x256xf32>
    %31 = arith.maximumf %27, %30 : vector<64x256xf32>
    %cst_15 = arith.constant 5.000000e-01 : f32
    %32 = vector.broadcast %cst_15 : f32 to vector<64x256xf32>
    %33 = arith.mulf %32, %28 : vector<64x256xf32>
    %34 = math.tanh %33 : vector<64x256xf32>
    %cst_16 = arith.constant 5.000000e-01 : f32
    %35 = vector.broadcast %cst_16 : f32 to vector<64x256xf32>
    %36 = arith.mulf %35, %34 : vector<64x256xf32>
    %cst_17 = arith.constant 5.000000e-01 : f32
    %37 = vector.broadcast %cst_17 : f32 to vector<64x256xf32>
    %38 = arith.addf %36, %37 : vector<64x256xf32>
    %39 = arith.mulf %31, %38 : vector<64x256xf32>
    %40 = arith.addf %39, %29 : vector<64x256xf32>
    %c0_18 = arith.constant 0 : index
    %c0_19 = arith.constant 0 : index
    %41 = vector.load %arg6[%c0_18, %c0_19] : memref<96x64xbf16, #tpu.memory_space<vmem>>, vector<96x64xbf16>
    %42 = arith.truncf %40 : vector<64x256xf32> to vector<64x256xbf16>
    %cst_20 = arith.constant dense<0.000000e+00> : vector<96x256xf32>
    %43 = tpu.matmul %41, %42, %cst_20 {dimension_numbers = #tpu.dot_dimension_numbers<[1], [0], [0], [1], [0, 0, 1, 1], [], []>} : vector<96x64xbf16>, vector<64x256xbf16>, vector<96x256xf32> -> vector<96x256xf32>
    %c0_21 = arith.constant 0 : index
    %c0_22 = arith.constant 0 : index
    %44 = vector.load %arg7[%c0_21, %c0_22] : memref<96x1xf32, #tpu.memory_space<vmem>>, vector<96x1xf32>
    %45 = vector.broadcast %44 : vector<96x1xf32> to vector<96x256xf32>
    %46 = arith.addf %43, %45 : vector<96x256xf32>
    %47 = vector.extract_strided_slice %46 {offsets = [0, 0], sizes = [32, 256], strides = [1, 1]} : vector<96x256xf32> to vector<32x256xf32>
    %48 = vector.extract_strided_slice %46 {offsets = [32, 0], sizes = [32, 256], strides = [1, 1]} : vector<96x256xf32> to vector<32x256xf32>
    %49 = vector.extract_strided_slice %46 {offsets = [64, 0], sizes = [32, 256], strides = [1, 1]} : vector<96x256xf32> to vector<32x256xf32>
    %cst_23 = arith.constant 0.000000e+00 : f32
    %50 = vector.broadcast %cst_23 : f32 to vector<32x256xf32>
    %51 = arith.maximumf %47, %50 : vector<32x256xf32>
    %cst_24 = arith.constant 5.000000e-01 : f32
    %52 = vector.broadcast %cst_24 : f32 to vector<32x256xf32>
    %53 = arith.mulf %52, %48 : vector<32x256xf32>
    %54 = math.tanh %53 : vector<32x256xf32>
    %cst_25 = arith.constant 5.000000e-01 : f32
    %55 = vector.broadcast %cst_25 : f32 to vector<32x256xf32>
    %56 = arith.mulf %55, %54 : vector<32x256xf32>
    %cst_26 = arith.constant 5.000000e-01 : f32
    %57 = vector.broadcast %cst_26 : f32 to vector<32x256xf32>
    %58 = arith.addf %56, %57 : vector<32x256xf32>
    %59 = arith.mulf %51, %58 : vector<32x256xf32>
    %60 = arith.addf %59, %49 : vector<32x256xf32>
    %c0_27 = arith.constant 0 : index
    %c0_28 = arith.constant 0 : index
    %61 = vector.load %arg8[%c0_27, %c0_28] : memref<1x32xbf16, #tpu.memory_space<vmem>>, vector<1x32xbf16>
    %62 = arith.truncf %60 : vector<32x256xf32> to vector<32x256xbf16>
    %cst_29 = arith.constant dense<0.000000e+00> : vector<1x256xf32>
    %63 = tpu.matmul %61, %62, %cst_29 {dimension_numbers = #tpu.dot_dimension_numbers<[1], [0], [0], [1], [0, 0, 1, 1], [], []>} : vector<1x32xbf16>, vector<32x256xbf16>, vector<1x256xf32> -> vector<1x256xf32>
    %c0_30 = arith.constant 0 : index
    %c0_31 = arith.constant 0 : index
    %64 = vector.load %arg9[%c0_30, %c0_31] : memref<1x1xf32, #tpu.memory_space<vmem>>, vector<1x1xf32>
    %65 = vector.broadcast %64 : vector<1x1xf32> to vector<1x256xf32>
    %66 = arith.addf %63, %65 : vector<1x256xf32>
    %c0_32 = arith.constant 0 : index
    %c0_33 = arith.constant 0 : index
    %67 = vector.load %arg10[%c0_32, %c0_33] : memref<1x256xf32, #tpu.memory_space<vmem>>, vector<1x256xf32>
    tpu.vector_store %arg10[%c0_32, %c0_33], %66 {strides = array<i32>} : memref<1x256xf32, #tpu.memory_space<vmem>>, vector<1x256xf32>,
    return
  }
  func.func @transform_0(%arg0: i32) -> (i32, i32) {
    %c0_i32 = arith.constant 0 : i32
    %c0_i32_0 = arith.constant 0 : i32
    return %arg0, %c0_i32 : i32, i32
  }
  func.func @transform_1(%arg0: i32) -> (i32, i32) {
    %c0_i32 = arith.constant 0 : i32
    %c0_i32_0 = arith.constant 0 : i32
    %c0_i32_1 = arith.constant 0 : i32
    return %c0_i32, %c0_i32_0 : i32, i32
  }
  func.func @transform_2(%arg0: i32) -> (i32, i32) {
    %c0_i32 = arith.constant 0 : i32
    %c0_i32_0 = arith.constant 0 : i32
    %c0_i32_1 = arith.constant 0 : i32
    return %c0_i32, %c0_i32_0 : i32, i32
  }
  func.func @transform_3(%arg0: i32) -> (i32, i32) {
    %c0_i32 = arith.constant 0 : i32
    %c0_i32_0 = arith.constant 0 : i32
    %c0_i32_1 = arith.constant 0 : i32
    return %c0_i32, %c0_i32_0 : i32, i32
  }
  func.func @transform_4(%arg0: i32) -> (i32, i32) {
    %c0_i32 = arith.constant 0 : i32
    %c0_i32_0 = arith.constant 0 : i32
    %c0_i32_1 = arith.constant 0 : i32
    return %c0_i32, %c0_i32_0 : i32, i32
  }
  func.func @transform_5(%arg0: i32) -> (i32, i32) {
    %c0_i32 = arith.constant 0 : i32
    %c0_i32_0 = arith.constant 0 : i32
    %c0_i32_1 = arith.constant 0 : i32
    return %c0_i32, %c0_i32_0 : i32, i32
  }
  func.func @transform_6(%arg0: i32) -> (i32, i32) {
    %c0_i32 = arith.constant 0 : i32
    %c0_i32_0 = arith.constant 0 : i32
    %c0_i32_1 = arith.constant 0 : i32
    return %c0_i32, %c0_i32_0 : i32, i32
  }
  func.func @transform_7(%arg0: i32) -> (i32, i32) {
    %c0_i32 = arith.constant 0 : i32
    %c0_i32_0 = arith.constant 0 : i32
    %c0_i32_1 = arith.constant 0 : i32
    return %c0_i32, %c0_i32_0 : i32, i32
  }
  func.func @transform_8(%arg0: i32) -> (i32, i32) {
    %c0_i32 = arith.constant 0 : i32
    %c0_i32_0 = arith.constant 0 : i32
    %c0_i32_1 = arith.constant 0 : i32
    return %c0_i32, %c0_i32_0 : i32, i32
  }
  func.func @transform_9(%arg0: i32) -> (i32, i32) {
    %c0_i32 = arith.constant 0 : i32
    %c0_i32_0 = arith.constant 0 : i32
    return %c0_i32, %arg0 : i32, i32
  }
}

</mosaic_0001>

<llo_original>
// kernel: tpu_custom_call.1
$region0: #{tpu_custom_call.1}
  #allocation0 [shape = 'u32[]', space=smem, size = 0x4, offset = 0x4, fixed_abs, tag = 'smem constant byte address 0x4 - core index']
  #allocation1 [shape = 'u32[144,128]{1,0:T(1,128)}', space=vmem, size = 0x12000, scoped, tag = 'internal scratch']
  #allocation2 [shape = 'f32[1,1]{1,0:T(1,128)S(1)}', space=vmem, size = 0x200, scoped, tag = 'scoped memory for tpu_custom_call.1']
  %s0 = inlined_call_operand.vmem [shape: f32[512,12], index: 0, kind: input, shape index: {}]
  %s1 = inlined_call_operand.vmem [shape: bf16[384,12], index: 1, kind: input, shape index: {}]
  %s2 = inlined_call_operand.vmem [shape: f32[384,1], index: 2, kind: input, shape index: {}]
  %s3 = inlined_call_operand.vmem [shape: bf16[192,128], index: 3, kind: input, shape index: {}]
  %s4 = inlined_call_operand.vmem [shape: f32[192,1], index: 4, kind: input, shape index: {}]
  %s5 = inlined_call_operand.vmem [shape: bf16[96,64], index: 5, kind: input, shape index: {}]
  %s6 = inlined_call_operand.vmem [shape: f32[96,1], index: 6, kind: input, shape index: {}]
  %s7 = inlined_call_operand.vmem [shape: bf16[1,32], index: 7, kind: input, shape index: {}]
  %s8 = inlined_call_operand.<no memory space> [shape: f32[1,1], index: 8, kind: input, shape index: {}]
  %s9 = inlined_call_operand.hbm [shape: f32[1,512], index: 9, kind: output, shape index: {}]
  %s10 = sld [smem:[#allocation0]]
  $region69: #{tpu_custom_call.1} parent=0
    _
  %s12 = ssub.s32 1, %s10
  %s13 = scalar_select 0, %s12, %s10
  %v14 = vstv %s8
  %15 = vst [vmem:[#allocation2] sm:$0x1] %v14
  $region1: #{tpu_custom_call.1} parent=0
    #allocation3 [shape = 'u8[2048]{0}', space=vmem, size = 0x800, scoped, tag = 'output window, operand 0']
    #allocation4 [shape = 's32[2]{0}', space=sflag, size = 0x8, scoped, tag = 'scoped memory for tpu_custom_call.1']
    %16 = vsyncpa [#allocation4], 0
    %s17 = scalar_lea.sflag [#allocation4], 1
    %18 = vsyncpa %s17, 0
    loop: start=0, step=1, limit=4
    $region2: #{tpu_custom_call.1} parent=1 // loop_pre_header
      _
    $region3: #{tpu_custom_call.1} parent=1 // loop_header
      %s20 = sphi 0, %s24
      %p21 = scmp.ge.s32.totalorder %s20, 4
      %s30 = sphi 0, %s32
      %s33 = sphi 0, %s30
      %s34 = sphi 0, %s33
      %s50 = sphi 0, %s34
      %s54 = sphi 0, %s54
      %s56 = sphi 0, %s54
      %s57 = sphi 0, %s56
      %s71 = sphi 0, %s57
      %s75 = sphi 0, %s75
      %s77 = sphi 0, %s75
      %s78 = sphi 0, %s77
      %s92 = sphi 0, %s78
      %s96 = sphi 0, %s96
      %s98 = sphi 0, %s96
      %s99 = sphi 0, %s98
      %s113 = sphi 0, %s99
      %s117 = sphi 0, %s117
      %s119 = sphi 0, %s117
      %s120 = sphi 0, %s119
      %s134 = sphi 0, %s120
      %s138 = sphi 0, %s138
      %s140 = sphi 0, %s138
      %s141 = sphi 0, %s140
      %s155 = sphi 0, %s141
      %s159 = sphi 0, %s159
      %s161 = sphi 0, %s159
      %s162 = sphi 0, %s161
      %s176 = sphi 0, %s162
      %s180 = sphi 0, %s180
      %s182 = sphi 0, %s180
      %s183 = sphi 0, %s182
      %s197 = sphi 0, %s183
      %s201 = sphi 0, %s201
      %s203 = sphi 0, %s201
      %s204 = sphi 0, %s203
      %s218 = sphi 0, %s204
      %s224 = sphi 0, %s226
      %s227 = sphi 0, %s224
      %s228 = sphi 0, %s227
      %s244 = sphi 0, %s228
    $region4: #{tpu_custom_call.1} parent=1 // loop_header_branch
      %23 = sbr.rel (%p21) target = $region8
    $region5: #{tpu_custom_call.1} parent=1 // loop_body
      %s25 = ssub.s32 %s20, 1
      %s26 = ssub.s32 %s20, 2
      %s27 = sadd.s32 %s20, 1
      %s28 = ssub.s32 %s20, %s27
      %p29 = scmp.eq.s32.totalorder %s28, 0
      %s31 = sadd.s32 %s30, 1
      %s32 = scalar_select %p29, %s30, %s31
      %p35 = pneg %p29
      %p36 = scmp.eq.s32.totalorder %s20, 1
      %p37 = por %p35, %p36
      %p38 = scmp.ne.s32.totalorder %s30, %s33
      %p39 = scmp.eq.s32.totalorder %s20, 0
      %p40 = por %p38, %p39
      %p41 = scmp.ne.s32.totalorder %s30, %s33
      %p42 = scmp.eq.s32.totalorder %s25, 1
      %p43 = por %p41, %p42
      %p44 = scmp.ne.s32.totalorder %s33, %s34
      %p45 = scmp.eq.s32.totalorder %s25, 0
      %p46 = por %p44, %p45
      %p47 = scmp.ne.s32.totalorder %s33, %s34
      %p48 = scmp.eq.s32.totalorder %s26, 1
      %p49 = por %p47, %p48
      %p51 = scmp.ne.s32.totalorder %s34, %s50
      %p52 = scmp.eq.s32.totalorder %s26, 0
      %p53 = por %p51, %p52
      %s55 = sadd.s32 %s54, 1
      %p58 = scmp.eq.s32.totalorder %s20, 1
      %p59 = scmp.ne.s32.totalorder %s54, %s56
      %p60 = scmp.eq.s32.totalorder %s20, 0
      %p61 = por %p59, %p60
      %p62 = scmp.ne.s32.totalorder %s54, %s56
      %p63 = scmp.eq.s32.totalorder %s25, 1
      %p64 = por %p62, %p63
      %p65 = scmp.ne.s32.totalorder %s56, %s57
      %p66 = scmp.eq.s32.totalorder %s25, 0
      %p67 = por %p65, %p66
      %p68 = scmp.ne.s32.totalorder %s56, %s57
      %p69 = scmp.eq.s32.totalorder %s26, 1
      %p70 = por %p68, %p69
      %p72 = scmp.ne.s32.totalorder %s57, %s71
      %p73 = scmp.eq.s32.totalorder %s26, 0
      %p74 = por %p72, %p73
      %s76 = sadd.s32 %s75, 1
      %p79 = scmp.eq.s32.totalorder %s20, 1
      %p80 = scmp.ne.s32.totalorder %s75, %s77
      %p81 = scmp.eq.s32.totalorder %s20, 0
      %p82 = por %p80, %p81
      %p83 = scmp.ne.s32.totalorder %s75, %s77
      %p84 = scmp.eq.s32.totalorder %s25, 1
      %p85 = por %p83, %p84
      %p86 = scmp.ne.s32.totalorder %s77, %s78
      %p87 = scmp.eq.s32.totalorder %s25, 0
      %p88 = por %p86, %p87
      %p89 = scmp.ne.s32.totalorder %s77, %s78
      %p90 = scmp.eq.s32.totalorder %s26, 1
      %p91 = por %p89, %p90
      %p93 = scmp.ne.s32.totalorder %s78, %s92
      %p94 = scmp.eq.s32.totalorder %s26, 0
      %p95 = por %p93, %p94
      %s97 = sadd.s32 %s96, 1
      %p100 = scmp.eq.s32.totalorder %s20, 1
      %p101 = scmp.ne.s32.totalorder %s96, %s98
      %p102 = scmp.eq.s32.totalorder %s20, 0
      %p103 = por %p101, %p102
      %p104 = scmp.ne.s32.totalorder %s96, %s98
      %p105 = scmp.eq.s32.totalorder %s25, 1
      %p106 = por %p104, %p105
      %p107 = scmp.ne.s32.totalorder %s98, %s99
      %p108 = scmp.eq.s32.totalorder %s25, 0
      %p109 = por %p107, %p108
      %p110 = scmp.ne.s32.totalorder %s98, %s99
      %p111 = scmp.eq.s32.totalorder %s26, 1
      %p112 = por %p110, %p111
      %p114 = scmp.ne.s32.totalorder %s99, %s113
      %p115 = scmp.eq.s32.totalorder %s26, 0
      %p116 = por %p114, %p115
      %s118 = sadd.s32 %s117, 1
      %p121 = scmp.eq.s32.totalorder %s20, 1
      %p122 = scmp.ne.s32.totalorder %s117, %s119
      %p123 = scmp.eq.s32.totalorder %s20, 0
      %p124 = por %p122, %p123
      %p125 = scmp.ne.s32.totalorder %s117, %s119
      %p126 = scmp.eq.s32.totalorder %s25, 1
      %p127 = por %p125, %p126
      %p128 = scmp.ne.s32.totalorder %s119, %s120
      %p129 = scmp.eq.s32.totalorder %s25, 0
      %p130 = por %p128, %p129
      %p131 = scmp.ne.s32.totalorder %s119, %s120
      %p132 = scmp.eq.s32.totalorder %s26, 1
      %p133 = por %p131, %p132
      %p135 = scmp.ne.s32.totalorder %s120, %s134
      %p136 = scmp.eq.s32.totalorder %s26, 0
      %p137 = por %p135, %p136
      %s139 = sadd.s32 %s138, 1
      %p142 = scmp.eq.s32.totalorder %s20, 1
      %p143 = scmp.ne.s32.totalorder %s138, %s140
      %p144 = scmp.eq.s32.totalorder %s20, 0
      %p145 = por %p143, %p144
      %p146 = scmp.ne.s32.totalorder %s138, %s140
      %p147 = scmp.eq.s32.totalorder %s25, 1
      %p148 = por %p146, %p147
      %p149 = scmp.ne.s32.totalorder %s140, %s141
      %p150 = scmp.eq.s32.totalorder %s25, 0
      %p151 = por %p149, %p150
      %p152 = scmp.ne.s32.totalorder %s140, %s141
      %p153 = scmp.eq.s32.totalorder %s26, 1
      %p154 = por %p152, %p153
      %p156 = scmp.ne.s32.totalorder %s141, %s155
      %p157 = scmp.eq.s32.totalorder %s26, 0
      %p158 = por %p156, %p157
      %s160 = sadd.s32 %s159, 1
      %p163 = scmp.eq.s32.totalorder %s20, 1
      %p164 = scmp.ne.s32.totalorder %s159, %s161
      %p165 = scmp.eq.s32.totalorder %s20, 0
      %p166 = por %p164, %p165
      %p167 = scmp.ne.s32.totalorder %s159, %s161
      %p168 = scmp.eq.s32.totalorder %s25, 1
      %p169 = por %p167, %p168
      %p170 = scmp.ne.s32.totalorder %s161, %s162
      %p171 = scmp.eq.s32.totalorder %s25, 0
      %p172 = por %p170, %p171
      %p173 = scmp.ne.s32.totalorder %s161, %s162
      %p174 = scmp.eq.s32.totalorder %s26, 1
      %p175 = por %p173, %p174
      %p177 = scmp.ne.s32.totalorder %s162, %s176
      %p178 = scmp.eq.s32.totalorder %s26, 0
      %p179 = por %p177, %p178
      %s181 = sadd.s32 %s180, 1
      %p184 = scmp.eq.s32.totalorder %s20, 1
      %p185 = scmp.ne.s32.totalorder %s180, %s182
      %p186 = scmp.eq.s32.totalorder %s20, 0
      %p187 = por %p185, %p186
      %p188 = scmp.ne.s32.totalorder %s180, %s182
      %p189 = scmp.eq.s32.totalorder %s25, 1
      %p190 = por %p188, %p189
      %p191 = scmp.ne.s32.totalorder %s182, %s183
      %p192 = scmp.eq.s32.totalorder %s25, 0
      %p193 = por %p191, %p192
      %p194 = scmp.ne.s32.totalorder %s182, %s183
      %p195 = scmp.eq.s32.totalorder %s26, 1
      %p196 = por %p194, %p195
      %p198 = scmp.ne.s32.totalorder %s183, %s197
      %p199 = scmp.eq.s32.totalorder %s26, 0
      %p200 = por %p198, %p199
      %s202 = sadd.s32 %s201, 1
      %p205 = scmp.eq.s32.totalorder %s20, 1
      %p206 = scmp.ne.s32.totalorder %s201, %s203
      %p207 = scmp.eq.s32.totalorder %s20, 0
      %p208 = por %p206, %p207
      %p209 = scmp.ne.s32.totalorder %s201, %s203
      %p210 = scmp.eq.s32.totalorder %s25, 1
      %p211 = por %p209, %p210
      %p212 = scmp.ne.s32.totalorder %s203, %s204
      %p213 = scmp.eq.s32.totalorder %s25, 0
      %p214 = por %p212, %p213
      %p215 = scmp.ne.s32.totalorder %s203, %s204
      %p216 = scmp.eq.s32.totalorder %s26, 1
      %p217 = por %p215, %p216
      %p219 = scmp.ne.s32.totalorder %s204, %s218
      %p220 = scmp.eq.s32.totalorder %s26, 0
      %p221 = por %p219, %p220
      %s222 = ssub.s32 %s20, %s27
      %p223 = scmp.eq.s32.totalorder %s222, 0
      %s225 = sadd.s32 %s224, 1
      %s226 = scalar_select %p223, %s224, %s225
      %p229 = pneg %p223
      %p230 = scmp.eq.s32.totalorder %s20, 1
      %p231 = por %p229, %p230
      %p232 = scmp.ne.s32.totalorder %s224, %s227
      %p233 = scmp.eq.s32.totalorder %s20, 0
      %p234 = por %p232, %p233
      %p235 = scmp.ne.s32.totalorder %s224, %s227
      %p236 = scmp.eq.s32.totalorder %s25, 1
      %p237 = por %p235, %p236
      %p238 = scmp.ne.s32.totalorder %s227, %s228
      %p239 = scmp.eq.s32.totalorder %s25, 0
      %p240 = por %p238, %p239
      %p241 = scmp.ne.s32.totalorder %s227, %s228
      %p242 = scmp.eq.s32.totalorder %s26, 1
      %p243 = por %p241, %p242
      %p245 = scmp.ne.s32.totalorder %s228, %s244
      %p246 = scmp.eq.s32.totalorder %s26, 0
      %p247 = por %p245, %p246
      %p248 = scmp.le.s32.totalorder 1, %s20
      %p249 = scmp.lt.s32.totalorder %s20, 3
      %p250 = pnand %p248, %p249
      %p251 = pneg %p250
      // Predicated region
      $region9: #{tpu_custom_call.1} parent=5 // pred_check
        _
      $region10: #{tpu_custom_call.1} parent=5 // pred_check_branch
        %253 = sbr.rel (%p250) target = $region12
      $region11: #{tpu_custom_call.1} parent=5 // pred_region
        %s254 = ssub.s32 %s20, 1
        // Predicated region
        $region13: #{tpu_custom_call.1} parent=11 // pred_check
          %p255 = pneg %p67
        $region14: #{tpu_custom_call.1} parent=11 // pred_check_branch
          %257 = sbr.rel (%p255) target = $region16
        $region15: #{tpu_custom_call.1} parent=11 // pred_region
          _
        $region16: #{tpu_custom_call.1} parent=11 // pred_fallthru
          _
        // Predicated region
        $region17: #{tpu_custom_call.1} parent=11 // pred_check
          %p258 = pneg %p88
        $region18: #{tpu_custom_call.1} parent=11 // pred_check_branch
          %260 = sbr.rel (%p258) target = $region20
        $region19: #{tpu_custom_call.1} parent=11 // pred_region
          _
        $region20: #{tpu_custom_call.1} parent=11 // pred_fallthru
          _
        // Predicated region
        $region21: #{tpu_custom_call.1} parent=11 // pred_check
          %p261 = pneg %p109
        $region22: #{tpu_custom_call.1} parent=11 // pred_check_branch
          %263 = sbr.rel (%p261) target = $region24
        $region23: #{tpu_custom_call.1} parent=11 // pred_region
          _
        $region24: #{tpu_custom_call.1} parent=11 // pred_fallthru
          _
        // Predicated region
        $region25: #{tpu_custom_call.1} parent=11 // pred_check
          %p264 = pneg %p130
        $region26: #{tpu_custom_call.1} parent=11 // pred_check_branch
          %266 = sbr.rel (%p264) target = $region28
        $region27: #{tpu_custom_call.1} parent=11 // pred_region
          _
        $region28: #{tpu_custom_call.1} parent=11 // pred_fallthru
          _
        // Predicated region
        $region29: #{tpu_custom_call.1} parent=11 // pred_check
          %p267 = pneg %p151
        $region30: #{tpu_custom_call.1} parent=11 // pred_check_branch
          %269 = sbr.rel (%p267) target = $region32
        $region31: #{tpu_custom_call.1} parent=11 // pred_region
          _
        $region32: #{tpu_custom_call.1} parent=11 // pred_fallthru
          _
        // Predicated region
        $region33: #{tpu_custom_call.1} parent=11 // pred_check
          %p270 = pneg %p172
        $region34: #{tpu_custom_call.1} parent=11 // pred_check_branch
          %272 = sbr.rel (%p270) target = $region36
        $region35: #{tpu_custom_call.1} parent=11 // pred_region
          _
        $region36: #{tpu_custom_call.1} parent=11 // pred_fallthru
          _
        // Predicated region
        $region37: #{tpu_custom_call.1} parent=11 // pred_check
          %p273 = pneg %p193
        $region38: #{tpu_custom_call.1} parent=11 // pred_check_branch
          %275 = sbr.rel (%p273) target = $region40
        $region39: #{tpu_custom_call.1} parent=11 // pred_region
          _
        $region40: #{tpu_custom_call.1} parent=11 // pred_fallthru
          _
        // Predicated region
        $region41: #{tpu_custom_call.1} parent=11 // pred_check
          %p276 = pneg %p214
        $region42: #{tpu_custom_call.1} parent=11 // pred_check_branch
          %278 = sbr.rel (%p276) target = $region44
        $region43: #{tpu_custom_call.1} parent=11 // pred_region
          _
        $region44: #{tpu_custom_call.1} parent=11 // pred_fallthru
          _
      $region12: #{tpu_custom_call.1} parent=5 // pred_fallthru
        _
      %p279 = scmp.lt.s32.totalorder %s20, 2
      // Predicated region
      $region45: #{tpu_custom_call.1} parent=5 // pred_check
        %p280 = pneg %p279
      $region46: #{tpu_custom_call.1} parent=5 // pred_check_branch
        %282 = sbr.rel (%p280) target = $region48
      $region47: #{tpu_custom_call.1} parent=5 // pred_region
        // Predicated region
        $region49: #{tpu_custom_call.1} parent=47 // pred_check
          %p283 = pneg %p40
        $region50: #{tpu_custom_call.1} parent=47 // pred_check_branch
          %285 = sbr.rel (%p283) target = $region52
        $region51: #{tpu_custom_call.1} parent=47 // pred_region
          %s286 = smul.u32 32, %s20
          %p287 = scmp.lt.s32.totalorder %s286, 63
          %s288 = scalar_select %p287, %s286, 63
          %s289 = smul.addr %s288, 8
          %s290 = scalar_lea.vmem %s0, %s289
          %s291 = smul.u32 32, %s20
        $region52: #{tpu_custom_call.1} parent=47 // pred_fallthru
          _
      $region48: #{tpu_custom_call.1} parent=5 // pred_fallthru
        _
      %p292 = scmp.le.s32.totalorder 1, %s20
      %p293 = scmp.lt.s32.totalorder %s20, 3
      %p294 = pnand %p292, %p293
      %p295 = pneg %p294
      // Predicated region
      $region53: #{tpu_custom_call.1} parent=5 // pred_check
        _
      $region54: #{tpu_custom_call.1} parent=5 // pred_check_branch
        %297 = sbr.rel (%p294) target = $region56
      $region55: #{tpu_custom_call.1} parent=5 // pred_region
        %s298 = ssub.s32 %s20, 1
        %s299 = smul.u32 32, %s25
        %p300 = scmp.lt.s32.totalorder %s299, 63
        %s301 = scalar_select %p300, %s299, 63
        %s302 = smul.addr %s301, 8
        %s303 = scalar_lea.vmem %s0, %s302
        %p304 = pneg %p46
        %p305 = pneg %p43
        %p306 = pneg %p67
        %p307 = pneg %p64
        %p308 = pneg %p88
        %p309 = pneg %p85
        %p310 = pneg %p109
        %p311 = pneg %p106
        %p312 = pneg %p130
        %p313 = pneg %p127
        %p314 = pneg %p151
        %p315 = pneg %p148
        %p316 = pneg %p172
        %p317 = pneg %p169
        %p318 = pneg %p193
        %p319 = pneg %p190
        %p320 = pneg %p214
        %p321 = pneg %p211
        %p322 = pneg %p240
        %p323 = pneg %p237
        %s324 = sand.u32 %s227, 1
        %s325 = scalar_lea.sflag [#allocation4], %s324
        %s326 = sand.u32 %s227, 1
        %s327 = smul.addr %s326, 2
        %s328 = scalar_lea.vmem [#allocation3], %s327
        %s329 = smul.u32 32, %s25
        %p330 = scmp.lt.s32.totalorder %s329, 63
        %s331 = scalar_select %p330, %s329, 63
        %s332 = smul.addr %s331, 8
        %s333 = scalar_lea.vmem %s0, %s332
        %s334 = smul.u32 32, %s25
        %s335 = smul.u32 2, %s25
        %v337 = vld [vmem:[%s333] sm:$0xff]
        %v338 = vld [vmem:[%s333 + $0x8] sm:$0xff]
        %v339 = vld [vmem:[%s333 + $0x10] sm:$0xff]
        %v340 = vld [vmem:[%s333 + $0x18] sm:$0xff]
        %v341 = vld [vmem:[%s333 + $0x20] sm:$0xff]
        %v342 = vld [vmem:[%s333 + $0x28] sm:$0xff]
        %v343 = vld [vmem:[%s333 + $0x30] sm:$0xff]
        %v344 = vld [vmem:[%s333 + $0x38] sm:$0xff]
        %v345 = vld [vmem:[%s333 + $0x40] sm:$0xff]
        %v346 = vld [vmem:[%s333 + $0x48] sm:$0xff]
        %v347 = vld [vmem:[%s333 + $0x50] sm:$0xff]
        %v348 = vld [vmem:[%s333 + $0x58] sm:$0xff]
        %v349 = vld [vmem:[%s333 + $0x60] sm:$0xff]
        %v350 = vld [vmem:[%s333 + $0x68] sm:$0xff]
        %v351 = vld [vmem:[%s333 + $0x70] sm:$0xff]
        %v352 = vld [vmem:[%s333 + $0x78] sm:$0xff]
        %v353 = vld [vmem:[%s333 + $0x80] sm:$0xff]
        %v354 = vld [vmem:[%s333 + $0x88] sm:$0xff]
        %v355 = vld [vmem:[%s333 + $0x90] sm:$0xff]
        %v356 = vld [vmem:[%s333 + $0x98] sm:$0xff]
        %v357 = vld [vmem:[%s333 + $0xa0] sm:$0xff]
        %v358 = vld [vmem:[%s333 + $0xa8] sm:$0xff]
        %v359 = vld [vmem:[%s333 + $0xb0] sm:$0xff]
        %v360 = vld [vmem:[%s333 + $0xb8] sm:$0xff]
        %v361 = vld [vmem:[%s333 + $0xc0] sm:$0xff]
        %v362 = vld [vmem:[%s333 + $0xc8] sm:$0xff]
        %v363 = vld [vmem:[%s333 + $0xd0] sm:$0xff]
        %v364 = vld [vmem:[%s333 + $0xd8] sm:$0xff]
        %v365 = vld [vmem:[%s333 + $0xe0] sm:$0xff]
        %v366 = vld [vmem:[%s333 + $0xe8] sm:$0xff]
        %v367 = vld [vmem:[%s333 + $0xf0] sm:$0xff]
        %v368 = vld [vmem:[%s333 + $0xf8] sm:$0xff]
        %v369 = vpack.c.bf16 %v338, %v337
        %v370 = vpack.c.bf16 %v340, %v339
        %v371 = vpack.c.bf16 %v342, %v341
        %v372 = vpack.c.bf16 %v344, %v343
        %v373 = vpack.c.bf16 %v346, %v345
        %v374 = vpack.c.bf16 %v348, %v347
        %v375 = vpack.c.bf16 %v350, %v349
        %v376 = vpack.c.bf16 %v352, %v351
        %v377 = vpack.c.bf16 %v354, %v353
        %v378 = vpack.c.bf16 %v356, %v355
        %v379 = vpack.c.bf16 %v358, %v357
        %v380 = vpack.c.bf16 %v360, %v359
        %v381 = vpack.c.bf16 %v362, %v361
        %v382 = vpack.c.bf16 %v364, %v363
        %v383 = vpack.c.bf16 %v366, %v365
        %v384 = vpack.c.bf16 %v368, %v367
        %v385 = vld [vmem:[%s1] sm:$0xf]
        %v386 = vld [vmem:[%s1 + $0x4] sm:$0xf]
        %v387 = vld [vmem:[%s1 + $0x8] sm:$0xf]
        %v388 = vld [vmem:[%s1 + $0xc] sm:$0xf]
        %v389 = vld [vmem:[%s1 + $0x10] sm:$0xf]
        %v390 = vld [vmem:[%s1 + $0x14] sm:$0xf]
        %v391 = vld [vmem:[%s1 + $0x18] sm:$0xf]
        %v392 = vld [vmem:[%s1 + $0x1c] sm:$0xf]
        %v393 = vld [vmem:[%s1 + $0x20] sm:$0xf]
        %v394 = vld [vmem:[%s1 + $0x24] sm:$0xf]
        %v395 = vld [vmem:[%s1 + $0x28] sm:$0xf]
        %v396 = vld [vmem:[%s1 + $0x2c] sm:$0xf]
        %v397 = vld [vmem:[%s1 + $0x30] sm:$0xf]
        %v398 = vld [vmem:[%s1 + $0x34] sm:$0xf]
        %v399 = vld [vmem:[%s1 + $0x38] sm:$0xf]
        %v400 = vld [vmem:[%s1 + $0x3c] sm:$0xf]
        %v401 = vld [vmem:[%s1 + $0x40] sm:$0xf]
        %v402 = vld [vmem:[%s1 + $0x44] sm:$0xf]
        %v403 = vld [vmem:[%s1 + $0x48] sm:$0xf]
        %v404 = vld [vmem:[%s1 + $0x4c] sm:$0xf]
        %v405 = vld [vmem:[%s1 + $0x50] sm:$0xf]
        %v406 = vld [vmem:[%s1 + $0x54] sm:$0xf]
        %v407 = vld [vmem:[%s1 + $0x58] sm:$0xf]
        %v408 = vld [vmem:[%s1 + $0x5c] sm:$0xf]
        %v409 = vld [vmem:[%s1 + $0x60] sm:$0xf]
        %v410 = vld [vmem:[%s1 + $0x64] sm:$0xf]
        %v411 = vld [vmem:[%s1 + $0x68] sm:$0xf]
        %v412 = vld [vmem:[%s1 + $0x6c] sm:$0xf]
        %v413 = vld [vmem:[%s1 + $0x70] sm:$0xf]
        %v414 = vld [vmem:[%s1 + $0x74] sm:$0xf]
        %v415 = vld [vmem:[%s1 + $0x78] sm:$0xf]
        %v416 = vld [vmem:[%s1 + $0x7c] sm:$0xf]
        %v417 = vld [vmem:[%s1 + $0x80] sm:$0xf]
        %v418 = vld [vmem:[%s1 + $0x84] sm:$0xf]
        %v419 = vld [vmem:[%s1 + $0x88] sm:$0xf]
        %v420 = vld [vmem:[%s1 + $0x8c] sm:$0xf]
        %v421 = vld [vmem:[%s1 + $0x90] sm:$0xf]
        %v422 = vld [vmem:[%s1 + $0x94] sm:$0xf]
        %v423 = vld [vmem:[%s1 + $0x98] sm:$0xf]
        %v424 = vld [vmem:[%s1 + $0x9c] sm:$0xf]
        %v425 = vld [vmem:[%s1 + $0xa0] sm:$0xf]
        %v426 = vld [vmem:[%s1 + $0xa4] sm:$0xf]
        %v427 = vld [vmem:[%s1 + $0xa8] sm:$0xf]
        %v428 = vld [vmem:[%s1 + $0xac] sm:$0xf]
        %v429 = vld [vmem:[%s1 + $0xb0] sm:$0xf]
        %v430 = vld [vmem:[%s1 + $0xb4] sm:$0xf]
        %v431 = vld [vmem:[%s1 + $0xb8] sm:$0xf]
        %v432 = vld [vmem:[%s1 + $0xbc] sm:$0xf]
        %v433 = vld [vmem:[%s2] sm:$0xff]
        %v434 = vld [vmem:[%s2 + $0x8] sm:$0xff]
        %v435 = vld [vmem:[%s2 + $0x10] sm:$0xff]
        %v436 = vld [vmem:[%s2 + $0x18] sm:$0xff]
        %v437 = vld [vmem:[%s2 + $0x20] sm:$0xff]
        %v438 = vld [vmem:[%s2 + $0x28] sm:$0xff]
        %v439 = vld [vmem:[%s2 + $0x30] sm:$0xff]
        %v440 = vld [vmem:[%s2 + $0x38] sm:$0xff]
        %v441 = vld [vmem:[%s2 + $0x40] sm:$0xff]
        %v442 = vld [vmem:[%s2 + $0x48] sm:$0xff]
        %v443 = vld [vmem:[%s2 + $0x50] sm:$0xff]
        %v444 = vld [vmem:[%s2 + $0x58] sm:$0xff]
        %v445 = vld [vmem:[%s2 + $0x60] sm:$0xff]
        %v446 = vld [vmem:[%s2 + $0x68] sm:$0xff]
        %v447 = vld [vmem:[%s2 + $0x70] sm:$0xff]
        %v448 = vld [vmem:[%s2 + $0x78] sm:$0xff]
        %v449 = vld [vmem:[%s2 + $0x80] sm:$0xff]
        %v450 = vld [vmem:[%s2 + $0x88] sm:$0xff]
        %v451 = vld [vmem:[%s2 + $0x90] sm:$0xff]
        %v452 = vld [vmem:[%s2 + $0x98] sm:$0xff]
        %v453 = vld [vmem:[%s2 + $0xa0] sm:$0xff]
        %v454 = vld [vmem:[%s2 + $0xa8] sm:$0xff]
        %v455 = vld [vmem:[%s2 + $0xb0] sm:$0xff]
        %v456 = vld [vmem:[%s2 + $0xb8] sm:$0xff]
        %v457 = vld [vmem:[%s2 + $0xc0] sm:$0xff]
        %v458 = vld [vmem:[%s2 + $0xc8] sm:$0xff]
        %v459 = vld [vmem:[%s2 + $0xd0] sm:$0xff]
        %v460 = vld [vmem:[%s2 + $0xd8] sm:$0xff]
        %v461 = vld [vmem:[%s2 + $0xe0] sm:$0xff]
        %v462 = vld [vmem:[%s2 + $0xe8] sm:$0xff]
        %v463 = vld [vmem:[%s2 + $0xf0] sm:$0xff]
        %v464 = vld [vmem:[%s2 + $0xf8] sm:$0xff]
        %v465 = vld [vmem:[%s2 + $0x100] sm:$0xff]
        %v466 = vld [vmem:[%s2 + $0x108] sm:$0xff]
        %v467 = vld [vmem:[%s2 + $0x110] sm:$0xff]
        %v468 = vld [vmem:[%s2 + $0x118] sm:$0xff]
        %v469 = vld [vmem:[%s2 + $0x120] sm:$0xff]
        %v470 = vld [vmem:[%s2 + $0x128] sm:$0xff]
        %v471 = vld [vmem:[%s2 + $0x130] sm:$0xff]
        %v472 = vld [vmem:[%s2 + $0x138] sm:$0xff]
        %v473 = vld [vmem:[%s2 + $0x140] sm:$0xff]
        %v474 = vld [vmem:[%s2 + $0x148] sm:$0xff]
        %v475 = vld [vmem:[%s2 + $0x150] sm:$0xff]
        %v476 = vld [vmem:[%s2 + $0x158] sm:$0xff]
        %v477 = vld [vmem:[%s2 + $0x160] sm:$0xff]
        %v478 = vld [vmem:[%s2 + $0x168] sm:$0xff]
        %v479 = vld [vmem:[%s2 + $0x170] sm:$0xff]
        %v480 = vld [vmem:[%s2 + $0x178] sm:$0xff]
        %482 = vset.pattern.permute.xlu0 0
        %483 = vperm.xlu0 %482, %v433
        %v484 = vpop.permute.xlu0 %483
        %487 = vset.pattern.permute.xlu0 0
        %488 = vperm.xlu0 %487, %v434
        %v489 = vpop.permute.xlu0 %488
        %492 = vset.pattern.permute.xlu0 0
        %493 = vperm.xlu0 %492, %v435
        %v494 = vpop.permute.xlu0 %493
        %497 = vset.pattern.permute.xlu0 0
        %498 = vperm.xlu0 %497, %v436
        %v499 = vpop.permute.xlu0 %498
        %502 = vset.pattern.permute.xlu0 0
        %503 = vperm.xlu0 %502, %v437
        %v504 = vpop.permute.xlu0 %503
        %507 = vset.pattern.permute.xlu0 0
        %508 = vperm.xlu0 %507, %v438
        %v509 = vpop.permute.xlu0 %508
        %512 = vset.pattern.permute.xlu0 0
        %513 = vperm.xlu0 %512, %v439
        %v514 = vpop.permute.xlu0 %513
        %517 = vset.pattern.permute.xlu0 0
        %518 = vperm.xlu0 %517, %v440
        %v519 = vpop.permute.xlu0 %518
        %522 = vset.pattern.permute.xlu0 0
        %523 = vperm.xlu0 %522, %v441
        %v524 = vpop.permute.xlu0 %523
        %527 = vset.pattern.permute.xlu0 0
        %528 = vperm.xlu0 %527, %v442
        %v529 = vpop.permute.xlu0 %528
        %532 = vset.pattern.permute.xlu0 0
        %533 = vperm.xlu0 %532, %v443
        %v534 = vpop.permute.xlu0 %533
        %537 = vset.pattern.permute.xlu0 0
        %538 = vperm.xlu0 %537, %v444
        %v539 = vpop.permute.xlu0 %538
        %542 = vset.pattern.permute.xlu0 0
        %543 = vperm.xlu0 %542, %v445
        %v544 = vpop.permute.xlu0 %543
        %547 = vset.pattern.permute.xlu0 0
        %548 = vperm.xlu0 %547, %v446
        %v549 = vpop.permute.xlu0 %548
        %552 = vset.pattern.permute.xlu0 0
        %553 = vperm.xlu0 %552, %v447
        %v554 = vpop.permute.xlu0 %553
        %557 = vset.pattern.permute.xlu0 0
        %558 = vperm.xlu0 %557, %v448
        %v559 = vpop.permute.xlu0 %558
        %562 = vset.pattern.permute.xlu0 0
        %563 = vperm.xlu0 %562, %v449
        %v564 = vpop.permute.xlu0 %563
        %567 = vset.pattern.permute.xlu0 0
        %568 = vperm.xlu0 %567, %v450
        %v569 = vpop.permute.xlu0 %568
        %572 = vset.pattern.permute.xlu0 0
        %573 = vperm.xlu0 %572, %v451
        %v574 = vpop.permute.xlu0 %573
        %577 = vset.pattern.permute.xlu0 0
        %578 = vperm.xlu0 %577, %v452
        %v579 = vpop.permute.xlu0 %578
        %582 = vset.pattern.permute.xlu0 0
        %583 = vperm.xlu0 %582, %v453
        %v584 = vpop.permute.xlu0 %583
        %587 = vset.pattern.permute.xlu0 0
        %588 = vperm.xlu0 %587, %v454
        %v589 = vpop.permute.xlu0 %588
        %592 = vset.pattern.permute.xlu0 0
        %593 = vperm.xlu0 %592, %v455
        %v594 = vpop.permute.xlu0 %593
        %597 = vset.pattern.permute.xlu0 0
        %598 = vperm.xlu0 %597, %v456
        %v599 = vpop.permute.xlu0 %598
        %602 = vset.pattern.permute.xlu0 0
        %603 = vperm.xlu0 %602, %v457
        %v604 = vpop.permute.xlu0 %603
        %607 = vset.pattern.permute.xlu0 0
        %608 = vperm.xlu0 %607, %v458
        %v609 = vpop.permute.xlu0 %608
        %612 = vset.pattern.permute.xlu0 0
        %613 = vperm.xlu0 %612, %v459
        %v614 = vpop.permute.xlu0 %613
        %617 = vset.pattern.permute.xlu0 0
        %618 = vperm.xlu0 %617, %v460
        %v619 = vpop.permute.xlu0 %618
        %622 = vset.pattern.permute.xlu0 0
        %623 = vperm.xlu0 %622, %v461
        %v624 = vpop.permute.xlu0 %623
        %627 = vset.pattern.permute.xlu0 0
        %628 = vperm.xlu0 %627, %v462
        %v629 = vpop.permute.xlu0 %628
        %632 = vset.pattern.permute.xlu0 0
        %633 = vperm.xlu0 %632, %v463
        %v634 = vpop.permute.xlu0 %633
        %637 = vset.pattern.permute.xlu0 0
        %638 = vperm.xlu0 %637, %v464
        %v639 = vpop.permute.xlu0 %638
        %642 = vset.pattern.permute.xlu0 0
        %643 = vperm.xlu0 %642, %v465
        %v644 = vpop.permute.xlu0 %643
        %647 = vset.pattern.permute.xlu0 0
        %648 = vperm.xlu0 %647, %v466
        %v649 = vpop.permute.xlu0 %648
        %652 = vset.pattern.permute.xlu0 0
        %653 = vperm.xlu0 %652, %v467
        %v654 = vpop.permute.xlu0 %653
        %657 = vset.pattern.permute.xlu0 0
        %658 = vperm.xlu0 %657, %v468
        %v659 = vpop.permute.xlu0 %658
        %662 = vset.pattern.permute.xlu0 0
        %663 = vperm.xlu0 %662, %v469
        %v664 = vpop.permute.xlu0 %663
        %667 = vset.pattern.permute.xlu0 0
        %668 = vperm.xlu0 %667, %v470
        %v669 = vpop.permute.xlu0 %668
        %672 = vset.pattern.permute.xlu0 0
        %673 = vperm.xlu0 %672, %v471
        %v674 = vpop.permute.xlu0 %673
        %677 = vset.pattern.permute.xlu0 0
        %678 = vperm.xlu0 %677, %v472
        %v679 = vpop.permute.xlu0 %678
        %682 = vset.pattern.permute.xlu0 0
        %683 = vperm.xlu0 %682, %v473
        %v684 = vpop.permute.xlu0 %683
        %687 = vset.pattern.permute.xlu0 0
        %688 = vperm.xlu0 %687, %v474
        %v689 = vpop.permute.xlu0 %688
        %692 = vset.pattern.permute.xlu0 0
        %693 = vperm.xlu0 %692, %v475
        %v694 = vpop.permute.xlu0 %693
        %697 = vset.pattern.permute.xlu0 0
        %698 = vperm.xlu0 %697, %v476
        %v699 = vpop.permute.xlu0 %698
        %702 = vset.pattern.permute.xlu0 0
        %703 = vperm.xlu0 %702, %v477
        %v704 = vpop.permute.xlu0 %703
        %707 = vset.pattern.permute.xlu0 0
        %708 = vperm.xlu0 %707, %v478
        %v709 = vpop.permute.xlu0 %708
        %712 = vset.pattern.permute.xlu0 0
        %713 = vperm.xlu0 %712, %v479
        %v714 = vpop.permute.xlu0 %713
        %717 = vset.pattern.permute.xlu0 0
        %718 = vperm.xlu0 %717, %v480
        %v719 = vpop.permute.xlu0 %718
        %v769 = vunpack.c.l.b16 %v385
        %v770 = vunpack.c.l.b16 %v386
        %v771 = vunpack.c.l.b16 %v387
        %v772 = vunpack.c.l.b16 %v388
        %v773 = vunpack.c.l.b16 %v389
        %v774 = vunpack.c.l.b16 %v390
        %v775 = vunpack.c.l.b16 %v391
        %v776 = vunpack.c.l.b16 %v392
        %v777 = vunpack.c.l.b16 %v393
        %v778 = vunpack.c.l.b16 %v394
        %v779 = vunpack.c.l.b16 %v395
        %v780 = vunpack.c.l.b16 %v396
        %v781 = vunpack.c.l.b16 %v397
        %v782 = vunpack.c.l.b16 %v398
        %v783 = vunpack.c.l.b16 %v399
        %v784 = vunpack.c.l.b16 %v400
        %v785 = vunpack.c.l.b16 %v401
        %v786 = vunpack.c.l.b16 %v402
        %v787 = vunpack.c.l.b16 %v403
        %v788 = vunpack.c.l.b16 %v404
        %v789 = vunpack.c.l.b16 %v405
        %v790 = vunpack.c.l.b16 %v406
        %v791 = vunpack.c.l.b16 %v407
        %v792 = vunpack.c.l.b16 %v408
        %v793 = vunpack.c.l.b16 %v409
        %v794 = vunpack.c.l.b16 %v410
        %v795 = vunpack.c.l.b16 %v411
        %v796 = vunpack.c.l.b16 %v412
        %v797 = vunpack.c.l.b16 %v413
        %v798 = vunpack.c.l.b16 %v414
        %v799 = vunpack.c.l.b16 %v415
        %v800 = vunpack.c.l.b16 %v416
        %v801 = vunpack.c.l.b16 %v417
        %v802 = vunpack.c.l.b16 %v418
        %v803 = vunpack.c.l.b16 %v419
        %v804 = vunpack.c.l.b16 %v420
        %v805 = vunpack.c.l.b16 %v421
        %v806 = vunpack.c.l.b16 %v422
        %v807 = vunpack.c.l.b16 %v423
        %v808 = vunpack.c.l.b16 %v424
        %v809 = vunpack.c.l.b16 %v425
        %v810 = vunpack.c.l.b16 %v426
        %v811 = vunpack.c.l.b16 %v427
        %v812 = vunpack.c.l.b16 %v428
        %v813 = vunpack.c.l.b16 %v429
        %v814 = vunpack.c.l.b16 %v430
        %v815 = vunpack.c.l.b16 %v431
        %v816 = vunpack.c.l.b16 %v432
        %v817 = vpack.c.b16 %v770, %v769
        %v818 = vpack.c.b16 %v772, %v771
        %v819 = vpack.c.b16 %v774, %v773
        %v820 = vpack.c.b16 %v776, %v775
        %v821 = vpack.c.b16 %v778, %v777
        %v822 = vpack.c.b16 %v780, %v779
        %v823 = vpack.c.b16 %v782, %v781
        %v824 = vpack.c.b16 %v784, %v783
        %v825 = vpack.c.b16 %v786, %v785
        %v826 = vpack.c.b16 %v788, %v787
        %v827 = vpack.c.b16 %v790, %v789
        %v828 = vpack.c.b16 %v792, %v791
        %v829 = vpack.c.b16 %v794, %v793
        %v830 = vpack.c.b16 %v796, %v795
        %v831 = vpack.c.b16 %v798, %v797
        %v832 = vpack.c.b16 %v800, %v799
        %v833 = vpack.c.b16 %v802, %v801
        %v834 = vpack.c.b16 %v804, %v803
        %v835 = vpack.c.b16 %v806, %v805
        %v836 = vpack.c.b16 %v808, %v807
        %v837 = vpack.c.b16 %v810, %v809
        %v838 = vpack.c.b16 %v812, %v811
        %v839 = vpack.c.b16 %v814, %v813
        %v840 = vpack.c.b16 %v816, %v815
        %vm841 = vcmask 97280
        %v843 = vsel %vm841, %v817, 0
        %v846 = vsel %vm841, %v818, 0
        %v849 = vsel %vm841, %v819, 0
        %v852 = vsel %vm841, %v820, 0
        %v855 = vsel %vm841, %v821, 0
        %v858 = vsel %vm841, %v822, 0
        %v861 = vsel %vm841, %v823, 0
        %v864 = vsel %vm841, %v824, 0
        %v867 = vsel %vm841, %v825, 0
        %v870 = vsel %vm841, %v826, 0
        %v873 = vsel %vm841, %v827, 0
        %v876 = vsel %vm841, %v828, 0
        %v879 = vsel %vm841, %v829, 0
        %v882 = vsel %vm841, %v830, 0
        %v885 = vsel %vm841, %v831, 0
        %v888 = vsel %vm841, %v832, 0
        %v891 = vsel %vm841, %v833, 0
        %v894 = vsel %vm841, %v834, 0
        %v897 = vsel %vm841, %v835, 0
        %v900 = vsel %vm841, %v836, 0
        %v903 = vsel %vm841, %v837, 0
        %v906 = vsel %vm841, %v838, 0
        %v909 = vsel %vm841, %v839, 0
        %v912 = vsel %vm841, %v840, 0
        %v915 = vsel %vm841, %v369, 0
        %v918 = vsel %vm841, %v370, 0
        %v921 = vsel %vm841, %v371, 0
        %v924 = vsel %vm841, %v372, 0
        %v927 = vsel %vm841, %v373, 0
        %v930 = vsel %vm841, %v374, 0
        %v933 = vsel %vm841, %v375, 0
        %v936 = vsel %vm841, %v376, 0
        %v939 = vsel %vm841, %v377, 0
        %v942 = vsel %vm841, %v378, 0
        %v945 = vsel %vm841, %v379, 0
        %v948 = vsel %vm841, %v380, 0
        %v951 = vsel %vm841, %v381, 0
        %v954 = vsel %vm841, %v382, 0
        %v957 = vsel %vm841, %v383, 0
        %v960 = vsel %vm841, %v384, 0
        %962 = vmatprep.subr.bf16.mxu0 0
        %963 = vmatpush1.bf16.xpose.msra.mxu0 %v915
        %964 = vmatprep.subr.bf16.mxu0 0
        %965 = vmatpush1.bf16.xpose.msra.mxu0 %v918
        %966 = vmatprep.subr.bf16.mxu0 0
        %967 = vmatpush1.bf16.xpose.msra.mxu0 %v921
        %968 = vmatprep.subr.bf16.mxu0 0
        %969 = vmatpush1.bf16.xpose.msra.mxu0 %v924
        %970 = vmatprep.subr.bf16.mxu0 0
        %971 = vmatpush1.bf16.xpose.msra.mxu0 %v927
        %972 = vmatprep.subr.bf16.mxu0 0
        %973 = vmatpush1.bf16.xpose.msra.mxu0 %v930
        %974 = vmatprep.subr.bf16.mxu0 0
        %975 = vmatpush1.bf16.xpose.msra.mxu0 %v933
        %976 = vmatprep.subr.bf16.mxu0 0
        %977 = vmatpush1.bf16.xpose.msra.mxu0 %v936
        %978 = vmatprep.subr.bf16.mxu0 0
        %979 = vmatpush1.bf16.xpose.msra.mxu0 %v939
        %980 = vmatprep.subr.bf16.mxu0 0
        %981 = vmatpush1.bf16.xpose.msra.mxu0 %v942
        %982 = vmatprep.subr.bf16.mxu0 0
        %983 = vmatpush1.bf16.xpose.msra.mxu0 %v945
        %984 = vmatprep.subr.bf16.mxu0 0
        %985 = vmatpush1.bf16.xpose.msra.mxu0 %v948
        %986 = vmatprep.subr.bf16.mxu0 0
        %987 = vmatpush1.bf16.xpose.msra.mxu0 %v951
        %988 = vmatprep.subr.bf16.mxu0 0
        %989 = vmatpush1.bf16.xpose.msra.mxu0 %v954
        %990 = vmatprep.subr.bf16.mxu0 0
        %991 = vmatpush1.bf16.xpose.msra.mxu0 %v957
        %992 = vmatprep.subr.bf16.mxu0 0
        %993 = vmatpush1.bf16.xpose.msra.mxu0 %v960
        %994 = vmatprep.mubr.bf16.mxu0 0
        %995 = vmatmul.mubr.bf16.gmra.mrb[0].mxu0 %v843
        %v996 = vpop.f32.mrb[0].mxu0
        %v997 = vadd.f32 %v484, %v996
        %v998 = vpop.f32.mrb[0].mxu0
        %v999 = vadd.f32 %v484, %v998
        %v1000 = vpop.f32.mrb[0].mxu0
        %v1001 = vadd.f32 %v489, %v1000
        %v1002 = vpop.f32.mrb[0].mxu0
        %v1003 = vadd.f32 %v489, %v1002
        %1004 = vmatprep.mubr.bf16.mxu0 0
        %1005 = vmatmul.mubr.bf16.gmra.mrb[0].mxu0 %v846
        %v1006 = vpop.f32.mrb[0].mxu0
        %v1007 = vadd.f32 %v494, %v1006
        %v1008 = vpop.f32.mrb[0].mxu0
        %v1009 = vadd.f32 %v494, %v1008
        %v1010 = vpop.f32.mrb[0].mxu0
        %v1011 = vadd.f32 %v499, %v1010
        %v1012 = vpop.f32.mrb[0].mxu0
        %v1013 = vadd.f32 %v499, %v1012
        %1014 = vmatprep.mubr.bf16.mxu0 0
        %1015 = vmatmul.mubr.bf16.gmra.mrb[0].mxu0 %v849
        %v1016 = vpop.f32.mrb[0].mxu0
        %v1017 = vadd.f32 %v504, %v1016
        %v1018 = vpop.f32.mrb[0].mxu0
        %v1019 = vadd.f32 %v504, %v1018
        %v1020 = vpop.f32.mrb[0].mxu0
        %v1021 = vadd.f32 %v509, %v1020
        %v1022 = vpop.f32.mrb[0].mxu0
        %v1023 = vadd.f32 %v509, %v1022
        %1024 = vmatprep.mubr.bf16.mxu0 0
        %1025 = vmatmul.mubr.bf16.gmra.mrb[0].mxu0 %v852
        %v1026 = vpop.f32.mrb[0].mxu0
        %v1027 = vadd.f32 %v514, %v1026
        %v1028 = vpop.f32.mrb[0].mxu0
        %v1029 = vadd.f32 %v514, %v1028
        %v1030 = vpop.f32.mrb[0].mxu0
        %v1031 = vadd.f32 %v519, %v1030
        %v1032 = vpop.f32.mrb[0].mxu0
        %v1033 = vadd.f32 %v519, %v1032
        %1034 = vmatprep.mubr.bf16.mxu0 0
        %1035 = vmatmul.mubr.bf16.gmra.mrb[0].mxu0 %v855
        %v1036 = vpop.f32.mrb[0].mxu0
        %v1037 = vadd.f32 %v524, %v1036
        %v1038 = vpop.f32.mrb[0].mxu0
        %v1039 = vadd.f32 %v524, %v1038
        %v1040 = vpop.f32.mrb[0].mxu0
        %v1041 = vadd.f32 %v529, %v1040
        %v1042 = vpop.f32.mrb[0].mxu0
        %v1043 = vadd.f32 %v529, %v1042
        %1044 = vmatprep.mubr.bf16.mxu0 0
        %1045 = vmatmul.mubr.bf16.gmra.mrb[0].mxu0 %v858
        %v1046 = vpop.f32.mrb[0].mxu0
        %v1047 = vadd.f32 %v534, %v1046
        %v1048 = vpop.f32.mrb[0].mxu0
        %v1049 = vadd.f32 %v534, %v1048
        %v1050 = vpop.f32.mrb[0].mxu0
        %v1051 = vadd.f32 %v539, %v1050
        %v1052 = vpop.f32.mrb[0].mxu0
        %v1053 = vadd.f32 %v539, %v1052
        %1054 = vmatprep.mubr.bf16.mxu0 0
        %1055 = vmatmul.mubr.bf16.gmra.mrb[0].mxu0 %v861
        %v1056 = vpop.f32.mrb[0].mxu0
        %v1057 = vadd.f32 %v544, %v1056
        %v1058 = vpop.f32.mrb[0].mxu0
        %v1059 = vadd.f32 %v544, %v1058
        %v1060 = vpop.f32.mrb[0].mxu0
        %v1061 = vadd.f32 %v549, %v1060
        %v1062 = vpop.f32.mrb[0].mxu0
        %v1063 = vadd.f32 %v549, %v1062
        %1064 = vmatprep.mubr.bf16.mxu0 0
        %1065 = vmatmul.mubr.bf16.gmra.mrb[0].mxu0 %v864
        %v1066 = vpop.f32.mrb[0].mxu0
        %v1067 = vadd.f32 %v554, %v1066
        %v1068 = vpop.f32.mrb[0].mxu0
        %v1069 = vadd.f32 %v554, %v1068
        %v1070 = vpop.f32.mrb[0].mxu0
        %v1071 = vadd.f32 %v559, %v1070
        %v1072 = vpop.f32.mrb[0].mxu0
        %v1073 = vadd.f32 %v559, %v1072
        %1074 = vmatprep.mubr.bf16.mxu0 0
        %1075 = vmatmul.mubr.bf16.gmra.mrb[0].mxu0 %v867
        %v1076 = vpop.f32.mrb[0].mxu0
        %v1077 = vadd.f32 %v564, %v1076
        %v1078 = vpop.f32.mrb[0].mxu0
        %v1079 = vadd.f32 %v564, %v1078
        %v1080 = vpop.f32.mrb[0].mxu0
        %v1081 = vadd.f32 %v569, %v1080
        %v1082 = vpop.f32.mrb[0].mxu0
        %v1083 = vadd.f32 %v569, %v1082
        %1084 = vmatprep.mubr.bf16.mxu0 0
        %1085 = vmatmul.mubr.bf16.gmra.mrb[0].mxu0 %v870
        %v1086 = vpop.f32.mrb[0].mxu0
        %v1087 = vadd.f32 %v574, %v1086
        %v1088 = vpop.f32.mrb[0].mxu0
        %v1089 = vadd.f32 %v574, %v1088
        %v1090 = vpop.f32.mrb[0].mxu0
        %v1091 = vadd.f32 %v579, %v1090
        %v1092 = vpop.f32.mrb[0].mxu0
        %v1093 = vadd.f32 %v579, %v1092
        %1094 = vmatprep.mubr.bf16.mxu0 0
        %1095 = vmatmul.mubr.bf16.gmra.mrb[0].mxu0 %v873
        %v1096 = vpop.f32.mrb[0].mxu0
        %v1097 = vadd.f32 %v584, %v1096
        %v1098 = vpop.f32.mrb[0].mxu0
        %v1099 = vadd.f32 %v584, %v1098
        %v1100 = vpop.f32.mrb[0].mxu0
        %v1101 = vadd.f32 %v589, %v1100
        %v1102 = vpop.f32.mrb[0].mxu0
        %v1103 = vadd.f32 %v589, %v1102
        %1104 = vmatprep.mubr.bf16.mxu0 0
        %1105 = vmatmul.mubr.bf16.gmra.mrb[0].mxu0 %v876
        %v1106 = vpop.f32.mrb[0].mxu0
        %v1107 = vadd.f32 %v594, %v1106
        %v1108 = vpop.f32.mrb[0].mxu0
        %v1109 = vadd.f32 %v594, %v1108
        %v1110 = vpop.f32.mrb[0].mxu0
        %v1111 = vadd.f32 %v599, %v1110
        %v1112 = vpop.f32.mrb[0].mxu0
        %v1113 = vadd.f32 %v599, %v1112
        %1114 = vmatprep.mubr.bf16.mxu0 0
        %1115 = vmatmul.mubr.bf16.gmra.mrb[0].mxu0 %v879
        %v1116 = vpop.f32.mrb[0].mxu0
        %v1117 = vadd.f32 %v604, %v1116
        %v1118 = vpop.f32.mrb[0].mxu0
        %v1119 = vadd.f32 %v604, %v1118
        %v1120 = vpop.f32.mrb[0].mxu0
        %v1121 = vadd.f32 %v609, %v1120
        %v1122 = vpop.f32.mrb[0].mxu0
        %v1123 = vadd.f32 %v609, %v1122
        %1124 = vmatprep.mubr.bf16.mxu0 0
        %1125 = vmatmul.mubr.bf16.gmra.mrb[0].mxu0 %v882
        %v1126 = vpop.f32.mrb[0].mxu0
        %v1127 = vadd.f32 %v614, %v1126
        %v1128 = vpop.f32.mrb[0].mxu0
        %v1129 = vadd.f32 %v614, %v1128
        %v1130 = vpop.f32.mrb[0].mxu0
        %v1131 = vadd.f32 %v619, %v1130
        %v1132 = vpop.f32.mrb[0].mxu0
        %v1133 = vadd.f32 %v619, %v1132
        %1134 = vmatprep.mubr.bf16.mxu0 0
        %1135 = vmatmul.mubr.bf16.gmra.mrb[0].mxu0 %v885
        %v1136 = vpop.f32.mrb[0].mxu0
        %v1137 = vadd.f32 %v624, %v1136
        %v1138 = vpop.f32.mrb[0].mxu0
        %v1139 = vadd.f32 %v624, %v1138
        %v1140 = vpop.f32.mrb[0].mxu0
        %v1141 = vadd.f32 %v629, %v1140
        %v1142 = vpop.f32.mrb[0].mxu0
        %v1143 = vadd.f32 %v629, %v1142
        %1144 = vmatprep.mubr.bf16.mxu0 0
        %1145 = vmatmul.mubr.bf16.gmra.mrb[0].mxu0 %v888
        %v1146 = vpop.f32.mrb[0].mxu0
        %v1147 = vadd.f32 %v634, %v1146
        %v1148 = vpop.f32.mrb[0].mxu0
        %v1149 = vadd.f32 %v634, %v1148
        %v1150 = vpop.f32.mrb[0].mxu0
        %v1151 = vadd.f32 %v639, %v1150
        %v1152 = vpop.f32.mrb[0].mxu0
        %v1153 = vadd.f32 %v639, %v1152
        %1154 = vmatprep.mubr.bf16.mxu0 0
        %1155 = vmatmul.mubr.bf16.gmra.mrb[0].mxu0 %v891
        %v1156 = vpop.f32.mrb[0].mxu0
        %v1157 = vadd.f32 %v644, %v1156
        %v1158 = vpop.f32.mrb[0].mxu0
        %v1159 = vadd.f32 %v644, %v1158
        %v1160 = vpop.f32.mrb[0].mxu0
        %v1161 = vadd.f32 %v649, %v1160
        %v1162 = vpop.f32.mrb[0].mxu0
        %v1163 = vadd.f32 %v649, %v1162
        %1164 = vmatprep.mubr.bf16.mxu0 0
        %1165 = vmatmul.mubr.bf16.gmra.mrb[0].mxu0 %v894
        %v1166 = vpop.f32.mrb[0].mxu0
        %v1167 = vadd.f32 %v654, %v1166
        %v1168 = vpop.f32.mrb[0].mxu0
        %v1169 = vadd.f32 %v654, %v1168
        %v1170 = vpop.f32.mrb[0].mxu0
        %v1171 = vadd.f32 %v659, %v1170
        %v1172 = vpop.f32.mrb[0].mxu0
        %v1173 = vadd.f32 %v659, %v1172
        %1174 = vmatprep.mubr.bf16.mxu0 0
        %1175 = vmatmul.mubr.bf16.gmra.mrb[0].mxu0 %v897
        %v1176 = vpop.f32.mrb[0].mxu0
        %v1177 = vadd.f32 %v664, %v1176
        %v1178 = vpop.f32.mrb[0].mxu0
        %v1179 = vadd.f32 %v664, %v1178
        %v1180 = vpop.f32.mrb[0].mxu0
        %v1181 = vadd.f32 %v669, %v1180
        %v1182 = vpop.f32.mrb[0].mxu0
        %v1183 = vadd.f32 %v669, %v1182
        %1184 = vmatprep.mubr.bf16.mxu0 0
        %1185 = vmatmul.mubr.bf16.gmra.mrb[0].mxu0 %v900
        %v1186 = vpop.f32.mrb[0].mxu0
        %v1187 = vadd.f32 %v674, %v1186
        %v1188 = vpop.f32.mrb[0].mxu0
        %v1189 = vadd.f32 %v674, %v1188
        %v1190 = vpop.f32.mrb[0].mxu0
        %v1191 = vadd.f32 %v679, %v1190
        %v1192 = vpop.f32.mrb[0].mxu0
        %v1193 = vadd.f32 %v679, %v1192
        %1194 = vmatprep.mubr.bf16.mxu0 0
        %1195 = vmatmul.mubr.bf16.gmra.mrb[0].mxu0 %v903
        %v1196 = vpop.f32.mrb[0].mxu0
        %v1197 = vadd.f32 %v684, %v1196
        %v1198 = vpop.f32.mrb[0].mxu0
        %v1199 = vadd.f32 %v684, %v1198
        %v1200 = vpop.f32.mrb[0].mxu0
        %v1201 = vadd.f32 %v689, %v1200
        %v1202 = vpop.f32.mrb[0].mxu0
        %v1203 = vadd.f32 %v689, %v1202
        %1204 = vmatprep.mubr.bf16.mxu0 0
        %1205 = vmatmul.mubr.bf16.gmra.mrb[0].mxu0 %v906
        %v1206 = vpop.f32.mrb[0].mxu0
        %v1207 = vadd.f32 %v694, %v1206
        %v1208 = vpop.f32.mrb[0].mxu0
        %v1209 = vadd.f32 %v694, %v1208
        %v1210 = vpop.f32.mrb[0].mxu0
        %v1211 = vadd.f32 %v699, %v1210
        %v1212 = vpop.f32.mrb[0].mxu0
        %v1213 = vadd.f32 %v699, %v1212
        %1214 = vmatprep.mubr.bf16.mxu0 0
        %1215 = vmatmul.mubr.bf16.gmra.mrb[0].mxu0 %v909
        %v1216 = vpop.f32.mrb[0].mxu0
        %v1217 = vadd.f32 %v704, %v1216
        %v1218 = vpop.f32.mrb[0].mxu0
        %v1219 = vadd.f32 %v704, %v1218
        %v1220 = vpop.f32.mrb[0].mxu0
        %v1221 = vadd.f32 %v709, %v1220
        %v1222 = vpop.f32.mrb[0].mxu0
        %v1223 = vadd.f32 %v709, %v1222
        %1224 = vmatprep.mubr.bf16.mxu0 0
        %1225 = vmatmul.mubr.bf16.gmra.mrb[0].mxu0 %v912
        %v1226 = vpop.f32.mrb[0].mxu0
        %v1227 = vadd.f32 %v714, %v1226
        %v1228 = vpop.f32.mrb[0].mxu0
        %v1229 = vadd.f32 %v714, %v1228
        %v1230 = vpop.f32.mrb[0].mxu0
        %v1231 = vadd.f32 %v719, %v1230
        %v1232 = vpop.f32.mrb[0].mxu0
        %v1233 = vadd.f32 %v719, %v1232
        %1234 = vdwg.mxu0
        %v1235 = vmax.f32 %v997, 0.0
        %v1236 = vmax.f32 %v999, 0.0
        %v1237 = vmax.f32 %v1001, 0.0
        %v1238 = vmax.f32 %v1003, 0.0
        %v1239 = vmax.f32 %v1007, 0.0
        %v1240 = vmax.f32 %v1009, 0.0
        %v1241 = vmax.f32 %v1011, 0.0
        %v1242 = vmax.f32 %v1013, 0.0
        %v1243 = vmax.f32 %v1017, 0.0
        %v1244 = vmax.f32 %v1019, 0.0
        %v1245 = vmax.f32 %v1021, 0.0
        %v1246 = vmax.f32 %v1023, 0.0
        %v1247 = vmax.f32 %v1027, 0.0
        %v1248 = vmax.f32 %v1029, 0.0
        %v1249 = vmax.f32 %v1031, 0.0
        %v1250 = vmax.f32 %v1033, 0.0
        %v1251 = vmax.f32 %v1037, 0.0
        %v1252 = vmax.f32 %v1039, 0.0
        %v1253 = vmax.f32 %v1041, 0.0
        %v1254 = vmax.f32 %v1043, 0.0
        %v1255 = vmax.f32 %v1047, 0.0
        %v1256 = vmax.f32 %v1049, 0.0
        %v1257 = vmax.f32 %v1051, 0.0
        %v1258 = vmax.f32 %v1053, 0.0
        %v1259 = vmax.f32 %v1057, 0.0
        %v1260 = vmax.f32 %v1059, 0.0
        %v1261 = vmax.f32 %v1061, 0.0
        %v1262 = vmax.f32 %v1063, 0.0
        %v1263 = vmax.f32 %v1067, 0.0
        %v1264 = vmax.f32 %v1069, 0.0
        %v1265 = vmax.f32 %v1071, 0.0
        %v1266 = vmax.f32 %v1073, 0.0
        %v1267 = vmul.f32 %v1077, 0.5
        %v1268 = vmul.f32 %v1079, 0.5
        %v1269 = vmul.f32 %v1081, 0.5
        %v1270 = vmul.f32 %v1083, 0.5
        %v1271 = vmul.f32 %v1087, 0.5
        %v1272 = vmul.f32 %v1089, 0.5
        %v1273 = vmul.f32 %v1091, 0.5
        %v1274 = vmul.f32 %v1093, 0.5
        %v1275 = vmul.f32 %v1097, 0.5
        %v1276 = vmul.f32 %v1099, 0.5
        %v1277 = vmul.f32 %v1101, 0.5
        %v1278 = vmul.f32 %v1103, 0.5
        %v1279 = vmul.f32 %v1107, 0.5
        %v1280 = vmul.f32 %v1109, 0.5
        %v1281 = vmul.f32 %v1111, 0.5
        %v1282 = vmul.f32 %v1113, 0.5
        %v1283 = vmul.f32 %v1117, 0.5
        %v1284 = vmul.f32 %v1119, 0.5
        %v1285 = vmul.f32 %v1121, 0.5
        %v1286 = vmul.f32 %v1123, 0.5
        %v1287 = vmul.f32 %v1127, 0.5
        %v1288 = vmul.f32 %v1129, 0.5
        %v1289 = vmul.f32 %v1131, 0.5
        %v1290 = vmul.f32 %v1133, 0.5
        %v1291 = vmul.f32 %v1137, 0.5
        %v1292 = vmul.f32 %v1139, 0.5
        %v1293 = vmul.f32 %v1141, 0.5
        %v1294 = vmul.f32 %v1143, 0.5
        %v1295 = vmul.f32 %v1147, 0.5
        %v1296 = vmul.f32 %v1149, 0.5
        %v1297 = vmul.f32 %v1151, 0.5
        %v1298 = vmul.f32 %v1153, 0.5
        %v1299 = vtanh.pop %v1267
        %v1300 = vtanh.pop %v1268
        %v1301 = vtanh.pop %v1269
        %v1302 = vtanh.pop %v1270
        %v1303 = vtanh.pop %v1271
        %v1304 = vtanh.pop %v1272
        %v1305 = vtanh.pop %v1273
        %v1306 = vtanh.pop %v1274
        %v1307 = vtanh.pop %v1275
        %v1308 = vtanh.pop %v1276
        %v1309 = vtanh.pop %v1277
        %v1310 = vtanh.pop %v1278
        %v1311 = vtanh.pop %v1279
        %v1312 = vtanh.pop %v1280
        %v1313 = vtanh.pop %v1281
        %v1314 = vtanh.pop %v1282
        %v1315 = vtanh.pop %v1283
        %v1316 = vtanh.pop %v1284
        %v1317 = vtanh.pop %v1285
        %v1318 = vtanh.pop %v1286
        %v1319 = vtanh.pop %v1287
        %v1320 = vtanh.pop %v1288
        %v1321 = vtanh.pop %v1289
        %v1322 = vtanh.pop %v1290
        %v1323 = vtanh.pop %v1291
        %v1324 = vtanh.pop %v1292
        %v1325 = vtanh.pop %v1293
        %v1326 = vtanh.pop %v1294
        %v1327 = vtanh.pop %v1295
        %v1328 = vtanh.pop %v1296
        %v1329 = vtanh.pop %v1297
        %v1330 = vtanh.pop %v1298
        %v1331 = vmul.f32 %v1299, 0.5
        %v1332 = vmul.f32 %v1300, 0.5
        %v1333 = vmul.f32 %v1301, 0.5
        %v1334 = vmul.f32 %v1302, 0.5
        %v1335 = vmul.f32 %v1303, 0.5
        %v1336 = vmul.f32 %v1304, 0.5
        %v1337 = vmul.f32 %v1305, 0.5
        %v1338 = vmul.f32 %v1306, 0.5
        %v1339 = vmul.f32 %v1307, 0.5
        %v1340 = vmul.f32 %v1308, 0.5
        %v1341 = vmul.f32 %v1309, 0.5
        %v1342 = vmul.f32 %v1310, 0.5
        %v1343 = vmul.f32 %v1311, 0.5
        %v1344 = vmul.f32 %v1312, 0.5
        %v1345 = vmul.f32 %v1313, 0.5
        %v1346 = vmul.f32 %v1314, 0.5
        %v1347 = vmul.f32 %v1315, 0.5
        %v1348 = vmul.f32 %v1316, 0.5
        %v1349 = vmul.f32 %v1317, 0.5
        %v1350 = vmul.f32 %v1318, 0.5
        %v1351 = vmul.f32 %v1319, 0.5
        %v1352 = vmul.f32 %v1320, 0.5
        %v1353 = vmul.f32 %v1321, 0.5
        %v1354 = vmul.f32 %v1322, 0.5
        %v1355 = vmul.f32 %v1323, 0.5
        %v1356 = vmul.f32 %v1324, 0.5
        %v1357 = vmul.f32 %v1325, 0.5
        %v1358 = vmul.f32 %v1326, 0.5
        %v1359 = vmul.f32 %v1327, 0.5
        %v1360 = vmul.f32 %v1328, 0.5
        %v1361 = vmul.f32 %v1329, 0.5
        %v1362 = vmul.f32 %v1330, 0.5
        %v1363 = vadd.f32 %v1331, 0.5
        %v1364 = vadd.f32 %v1332, 0.5
        %v1365 = vadd.f32 %v1333, 0.5
        %v1366 = vadd.f32 %v1334, 0.5
        %v1367 = vadd.f32 %v1335, 0.5
        %v1368 = vadd.f32 %v1336, 0.5
        %v1369 = vadd.f32 %v1337, 0.5
        %v1370 = vadd.f32 %v1338, 0.5
        %v1371 = vadd.f32 %v1339, 0.5
        %v1372 = vadd.f32 %v1340, 0.5
        %v1373 = vadd.f32 %v1341, 0.5
        %v1374 = vadd.f32 %v1342, 0.5
        %v1375 = vadd.f32 %v1343, 0.5
        %v1376 = vadd.f32 %v1344, 0.5
        %v1377 = vadd.f32 %v1345, 0.5
        %v1378 = vadd.f32 %v1346, 0.5
        %v1379 = vadd.f32 %v1347, 0.5
        %v1380 = vadd.f32 %v1348, 0.5
        %v1381 = vadd.f32 %v1349, 0.5
        %v1382 = vadd.f32 %v1350, 0.5
        %v1383 = vadd.f32 %v1351, 0.5
        %v1384 = vadd.f32 %v1352, 0.5
        %v1385 = vadd.f32 %v1353, 0.5
        %v1386 = vadd.f32 %v1354, 0.5
        %v1387 = vadd.f32 %v1355, 0.5
        %v1388 = vadd.f32 %v1356, 0.5
        %v1389 = vadd.f32 %v1357, 0.5
        %v1390 = vadd.f32 %v1358, 0.5
        %v1391 = vadd.f32 %v1359, 0.5
        %v1392 = vadd.f32 %v1360, 0.5
        %v1393 = vadd.f32 %v1361, 0.5
        %v1394 = vadd.f32 %v1362, 0.5
        %v1395 = vmul.f32 %v1235, %v1363
        %v1396 = vmul.f32 %v1236, %v1364
        %v1397 = vmul.f32 %v1237, %v1365
        %v1398 = vmul.f32 %v1238, %v1366
        %v1399 = vmul.f32 %v1239, %v1367
        %v1400 = vmul.f32 %v1240, %v1368
        %v1401 = vmul.f32 %v1241, %v1369
        %v1402 = vmul.f32 %v1242, %v1370
        %v1403 = vmul.f32 %v1243, %v1371
        %v1404 = vmul.f32 %v1244, %v1372
        %v1405 = vmul.f32 %v1245, %v1373
        %v1406 = vmul.f32 %v1246, %v1374
        %v1407 = vmul.f32 %v1247, %v1375
        %v1408 = vmul.f32 %v1248, %v1376
        %v1409 = vmul.f32 %v1249, %v1377
        %v1410 = vmul.f32 %v1250, %v1378
        %v1411 = vmul.f32 %v1251, %v1379
        %v1412 = vmul.f32 %v1252, %v1380
        %v1413 = vmul.f32 %v1253, %v1381
        %v1414 = vmul.f32 %v1254, %v1382
        %v1415 = vmul.f32 %v1255, %v1383
        %v1416 = vmul.f32 %v1256, %v1384
        %v1417 = vmul.f32 %v1257, %v1385
        %v1418 = vmul.f32 %v1258, %v1386
        %v1419 = vmul.f32 %v1259, %v1387
        %v1420 = vmul.f32 %v1260, %v1388
        %v1421 = vmul.f32 %v1261, %v1389
        %v1422 = vmul.f32 %v1262, %v1390
        %v1423 = vmul.f32 %v1263, %v1391
        %v1424 = vmul.f32 %v1264, %v1392
        %v1425 = vmul.f32 %v1265, %v1393
        %v1426 = vmul.f32 %v1266, %v1394
        %v1427 = vadd.f32 %v1395, %v1157
        %v1428 = vadd.f32 %v1396, %v1159
        %v1429 = vadd.f32 %v1397, %v1161
        %v1430 = vadd.f32 %v1398, %v1163
        %v1431 = vadd.f32 %v1399, %v1167
        %v1432 = vadd.f32 %v1400, %v1169
        %v1433 = vadd.f32 %v1401, %v1171
        %v1434 = vadd.f32 %v1402, %v1173
        %v1435 = vadd.f32 %v1403, %v1177
        %v1436 = vadd.f32 %v1404, %v1179
        %v1437 = vadd.f32 %v1405, %v1181
        %v1438 = vadd.f32 %v1406, %v1183
        %v1439 = vadd.f32 %v1407, %v1187
        %v1440 = vadd.f32 %v1408, %v1189
        %v1441 = vadd.f32 %v1409, %v1191
        %v1442 = vadd.f32 %v1410, %v1193
        %v1443 = vadd.f32 %v1411, %v1197
        %v1444 = vadd.f32 %v1412, %v1199
        %v1445 = vadd.f32 %v1413, %v1201
        %v1446 = vadd.f32 %v1414, %v1203
        %v1447 = vadd.f32 %v1415, %v1207
        %v1448 = vadd.f32 %v1416, %v1209
        %v1449 = vadd.f32 %v1417, %v1211
        %v1450 = vadd.f32 %v1418, %v1213
        %v1451 = vadd.f32 %v1419, %v1217
        %v1452 = vadd.f32 %v1420, %v1219
        %v1453 = vadd.f32 %v1421, %v1221
        %v1454 = vadd.f32 %v1422, %v1223
        %v1455 = vadd.f32 %v1423, %v1227
        %v1456 = vadd.f32 %v1424, %v1229
        %v1457 = vadd.f32 %v1425, %v1231
        %v1458 = vadd.f32 %v1426, %v1233
        %v1459 = vld [vmem:[%s3] sm:$0xf]
        %v1460 = vld [vmem:[%s3 + $0x4] sm:$0xf]
        %v1461 = vld [vmem:[%s3 + $0x8] sm:$0xf]
        %v1462 = vld [vmem:[%s3 + $0xc] sm:$0xf]
        %v1463 = vld [vmem:[%s3 + $0x10] sm:$0xf]
        %v1464 = vld [vmem:[%s3 + $0x14] sm:$0xf]
        %v1465 = vld [vmem:[%s3 + $0x18] sm:$0xf]
        %v1466 = vld [vmem:[%s3 + $0x1c] sm:$0xf]
        %v1467 = vld [vmem:[%s3 + $0x20] sm:$0xf]
        %v1468 = vld [vmem:[%s3 + $0x24] sm:$0xf]
        %v1469 = vld [vmem:[%s3 + $0x28] sm:$0xf]
        %v1470 = vld [vmem:[%s3 + $0x2c] sm:$0xf]
        %v1471 = vld [vmem:[%s3 + $0x30] sm:$0xf]
        %v1472 = vld [vmem:[%s3 + $0x34] sm:$0xf]
        %v1473 = vld [vmem:[%s3 + $0x38] sm:$0xf]
        %v1474 = vld [vmem:[%s3 + $0x3c] sm:$0xf]
        %v1475 = vld [vmem:[%s3 + $0x40] sm:$0xf]
        %v1476 = vld [vmem:[%s3 + $0x44] sm:$0xf]
        %v1477 = vld [vmem:[%s3 + $0x48] sm:$0xf]
        %v1478 = vld [vmem:[%s3 + $0x4c] sm:$0xf]
        %v1479 = vld [vmem:[%s3 + $0x50] sm:$0xf]
        %v1480 = vld [vmem:[%s3 + $0x54] sm:$0xf]
        %v1481 = vld [vmem:[%s3 + $0x58] sm:$0xf]
        %v1482 = vld [vmem:[%s3 + $0x5c] sm:$0xf]
        %v1483 = vpack.c.bf16 %v1429, %v1427
        %v1484 = vpack.c.bf16 %v1430, %v1428
        %v1485 = vpack.c.bf16 %v1433, %v1431
        %v1486 = vpack.c.bf16 %v1434, %v1432
        %v1487 = vpack.c.bf16 %v1437, %v1435
        %v1488 = vpack.c.bf16 %v1438, %v1436
        %v1489 = vpack.c.bf16 %v1441, %v1439
        %v1490 = vpack.c.bf16 %v1442, %v1440
        %v1491 = vpack.c.bf16 %v1445, %v1443
        %v1492 = vpack.c.bf16 %v1446, %v1444
        %v1493 = vpack.c.bf16 %v1449, %v1447
        %v1494 = vpack.c.bf16 %v1450, %v1448
        %v1495 = vpack.c.bf16 %v1453, %v1451
        %v1496 = vpack.c.bf16 %v1454, %v1452
        %v1497 = vpack.c.bf16 %v1457, %v1455
        %v1498 = vpack.c.bf16 %v1458, %v1456
        %v1499 = vld [vmem:[%s4] sm:$0xff]
        %v1500 = vld [vmem:[%s4 + $0x8] sm:$0xff]
        %v1501 = vld [vmem:[%s4 + $0x10] sm:$0xff]
        %v1502 = vld [vmem:[%s4 + $0x18] sm:$0xff]
        %v1503 = vld [vmem:[%s4 + $0x20] sm:$0xff]
        %v1504 = vld [vmem:[%s4 + $0x28] sm:$0xff]
        %v1505 = vld [vmem:[%s4 + $0x30] sm:$0xff]
        %v1506 = vld [vmem:[%s4 + $0x38] sm:$0xff]
        %v1507 = vld [vmem:[%s4 + $0x40] sm:$0xff]
        %v1508 = vld [vmem:[%s4 + $0x48] sm:$0xff]
        %v1509 = vld [vmem:[%s4 + $0x50] sm:$0xff]
        %v1510 = vld [vmem:[%s4 + $0x58] sm:$0xff]
        %v1511 = vld [vmem:[%s4 + $0x60] sm:$0xff]
        %v1512 = vld [vmem:[%s4 + $0x68] sm:$0xff]
        %v1513 = vld [vmem:[%s4 + $0x70] sm:$0xff]
        %v1514 = vld [vmem:[%s4 + $0x78] sm:$0xff]
        %v1515 = vld [vmem:[%s4 + $0x80] sm:$0xff]
        %v1516 = vld [vmem:[%s4 + $0x88] sm:$0xff]
        %v1517 = vld [vmem:[%s4 + $0x90] sm:$0xff]
        %v1518 = vld [vmem:[%s4 + $0x98] sm:$0xff]
        %v1519 = vld [vmem:[%s4 + $0xa0] sm:$0xff]
        %v1520 = vld [vmem:[%s4 + $0xa8] sm:$0xff]
        %v1521 = vld [vmem:[%s4 + $0xb0] sm:$0xff]
        %v1522 = vld [vmem:[%s4 + $0xb8] sm:$0xff]
        %1524 = vset.pattern.permute.xlu0 0
        %1525 = vperm.xlu0 %1524, %v1499
        %v1526 = vpop.permute.xlu0 %1525
        %1529 = vset.pattern.permute.xlu0 0
        %1530 = vperm.xlu0 %1529, %v1500
        %v1531 = vpop.permute.xlu0 %1530
        %1534 = vset.pattern.permute.xlu0 0
        %1535 = vperm.xlu0 %1534, %v1501
        %v1536 = vpop.permute.xlu0 %1535
        %1539 = vset.pattern.permute.xlu0 0
        %1540 = vperm.xlu0 %1539, %v1502
        %v1541 = vpop.permute.xlu0 %1540
        %1544 = vset.pattern.permute.xlu0 0
        %1545 = vperm.xlu0 %1544, %v1503
        %v1546 = vpop.permute.xlu0 %1545
        %1549 = vset.pattern.permute.xlu0 0
        %1550 = vperm.xlu0 %1549, %v1504
        %v1551 = vpop.permute.xlu0 %1550
        %1554 = vset.pattern.permute.xlu0 0
        %1555 = vperm.xlu0 %1554, %v1505
        %v1556 = vpop.permute.xlu0 %1555
        %1559 = vset.pattern.permute.xlu0 0
        %1560 = vperm.xlu0 %1559, %v1506
        %v1561 = vpop.permute.xlu0 %1560
        %1564 = vset.pattern.permute.xlu0 0
        %1565 = vperm.xlu0 %1564, %v1507
        %v1566 = vpop.permute.xlu0 %1565
        %1569 = vset.pattern.permute.xlu0 0
        %1570 = vperm.xlu0 %1569, %v1508
        %v1571 = vpop.permute.xlu0 %1570
        %1574 = vset.pattern.permute.xlu0 0
        %1575 = vperm.xlu0 %1574, %v1509
        %v1576 = vpop.permute.xlu0 %1575
        %1579 = vset.pattern.permute.xlu0 0
        %1580 = vperm.xlu0 %1579, %v1510
        %v1581 = vpop.permute.xlu0 %1580
        %1584 = vset.pattern.permute.xlu0 0
        %1585 = vperm.xlu0 %1584, %v1511
        %v1586 = vpop.permute.xlu0 %1585
        %1589 = vset.pattern.permute.xlu0 0
        %1590 = vperm.xlu0 %1589, %v1512
        %v1591 = vpop.permute.xlu0 %1590
        %1594 = vset.pattern.permute.xlu0 0
        %1595 = vperm.xlu0 %1594, %v1513
        %v1596 = vpop.permute.xlu0 %1595
        %1599 = vset.pattern.permute.xlu0 0
        %1600 = vperm.xlu0 %1599, %v1514
        %v1601 = vpop.permute.xlu0 %1600
        %1604 = vset.pattern.permute.xlu0 0
        %1605 = vperm.xlu0 %1604, %v1515
        %v1606 = vpop.permute.xlu0 %1605
        %1609 = vset.pattern.permute.xlu0 0
        %1610 = vperm.xlu0 %1609, %v1516
        %v1611 = vpop.permute.xlu0 %1610
        %1614 = vset.pattern.permute.xlu0 0
        %1615 = vperm.xlu0 %1614, %v1517
        %v1616 = vpop.permute.xlu0 %1615
        %1619 = vset.pattern.permute.xlu0 0
        %1620 = vperm.xlu0 %1619, %v1518
        %v1621 = vpop.permute.xlu0 %1620
        %1624 = vset.pattern.permute.xlu0 0
        %1625 = vperm.xlu0 %1624, %v1519
        %v1626 = vpop.permute.xlu0 %1625
        %1629 = vset.pattern.permute.xlu0 0
        %1630 = vperm.xlu0 %1629, %v1520
        %v1631 = vpop.permute.xlu0 %1630
        %1634 = vset.pattern.permute.xlu0 0
        %1635 = vperm.xlu0 %1634, %v1521
        %v1636 = vpop.permute.xlu0 %1635
        %1639 = vset.pattern.permute.xlu0 0
        %1640 = vperm.xlu0 %1639, %v1522
        %v1641 = vpop.permute.xlu0 %1640
        %v1667 = vunpack.c.l.b16 %v1459
        %v1668 = vunpack.c.l.b16 %v1460
        %v1669 = vunpack.c.l.b16 %v1461
        %v1670 = vunpack.c.l.b16 %v1462
        %v1671 = vunpack.c.l.b16 %v1463
        %v1672 = vunpack.c.l.b16 %v1464
        %v1673 = vunpack.c.l.b16 %v1465
        %v1674 = vunpack.c.l.b16 %v1466
        %v1675 = vunpack.c.l.b16 %v1467
        %v1676 = vunpack.c.l.b16 %v1468
        %v1677 = vunpack.c.l.b16 %v1469
        %v1678 = vunpack.c.l.b16 %v1470
        %v1679 = vunpack.c.l.b16 %v1471
        %v1680 = vunpack.c.l.b16 %v1472
        %v1681 = vunpack.c.l.b16 %v1473
        %v1682 = vunpack.c.l.b16 %v1474
        %v1683 = vunpack.c.l.b16 %v1475
        %v1684 = vunpack.c.l.b16 %v1476
        %v1685 = vunpack.c.l.b16 %v1477
        %v1686 = vunpack.c.l.b16 %v1478
        %v1687 = vunpack.c.l.b16 %v1479
        %v1688 = vunpack.c.l.b16 %v1480
        %v1689 = vunpack.c.l.b16 %v1481
        %v1690 = vunpack.c.l.b16 %v1482
        %v1691 = vpack.c.b16 %v1668, %v1667
        %v1692 = vpack.c.b16 %v1670, %v1669
        %v1693 = vpack.c.b16 %v1672, %v1671
        %v1694 = vpack.c.b16 %v1674, %v1673
        %v1695 = vpack.c.b16 %v1676, %v1675
        %v1696 = vpack.c.b16 %v1678, %v1677
        %v1697 = vpack.c.b16 %v1680, %v1679
        %v1698 = vpack.c.b16 %v1682, %v1681
        %v1699 = vpack.c.b16 %v1684, %v1683
        %v1700 = vpack.c.b16 %v1686, %v1685
        %v1701 = vpack.c.b16 %v1688, %v1687
        %v1702 = vpack.c.b16 %v1690, %v1689
        %1715 = vmatprep.subr.bf16.mxu0 %v1484
        %1716 = vmatpush1.bf16.msra.mxu0 %v1483
        %1717 = vmatprep.subr.bf16.mxu0 %v1486
        %1718 = vmatpush1.bf16.msra.mxu0 %v1485
        %1719 = vmatprep.subr.bf16.mxu0 %v1488
        %1720 = vmatpush1.bf16.msra.mxu0 %v1487
        %1721 = vmatprep.subr.bf16.mxu0 %v1490
        %1722 = vmatpush1.bf16.msra.mxu0 %v1489
        %1723 = vmatprep.subr.bf16.mxu0 %v1492
        %1724 = vmatpush1.bf16.msra.mxu0 %v1491
        %1725 = vmatprep.subr.bf16.mxu0 %v1494
        %1726 = vmatpush1.bf16.msra.mxu0 %v1493
        %1727 = vmatprep.subr.bf16.mxu0 %v1496
        %1728 = vmatpush1.bf16.msra.mxu0 %v1495
        %1729 = vmatprep.subr.bf16.mxu0 %v1498
        %1730 = vmatpush1.bf16.msra.mxu0 %v1497
        %1731 = vmatprep.subr.bf16.mxu0 0
        %1732 = vmatpush1.bf16.msra.mxu0 0
        %1733 = vmatprep.subr.bf16.mxu0 0
        %1734 = vmatpush1.bf16.msra.mxu0 0
        %1735 = vmatprep.subr.bf16.mxu0 0
        %1736 = vmatpush1.bf16.msra.mxu0 0
        %1737 = vmatprep.subr.bf16.mxu0 0
        %1738 = vmatpush1.bf16.msra.mxu0 0
        %1739 = vmatprep.subr.bf16.mxu0 0
        %1740 = vmatpush1.bf16.msra.mxu0 0
        %1741 = vmatprep.subr.bf16.mxu0 0
        %1742 = vmatpush1.bf16.msra.mxu0 0
        %1743 = vmatprep.subr.bf16.mxu0 0
        %1744 = vmatpush1.bf16.msra.mxu0 0
        %1745 = vmatprep.subr.bf16.mxu0 0
        %1746 = vmatpush1.bf16.msra.mxu0 0
        %1747 = vmatprep.mubr.bf16.mxu0 0
        %1748 = vmatmul.mubr.bf16.gmra.mrb[0].mxu0 %v1691
        %v1749 = vpop.f32.mrb[0].mxu0
        %v1750 = vadd.f32 %v1526, %v1749
        %v1751 = vpop.f32.mrb[0].mxu0
        %v1752 = vadd.f32 %v1526, %v1751
        %v1753 = vpop.f32.mrb[0].mxu0
        %v1754 = vadd.f32 %v1531, %v1753
        %v1755 = vpop.f32.mrb[0].mxu0
        %v1756 = vadd.f32 %v1531, %v1755
        %1757 = vmatprep.mubr.bf16.mxu0 0
        %1758 = vmatmul.mubr.bf16.gmra.mrb[0].mxu0 %v1692
        %v1759 = vpop.f32.mrb[0].mxu0
        %v1760 = vadd.f32 %v1536, %v1759
        %v1761 = vpop.f32.mrb[0].mxu0
        %v1762 = vadd.f32 %v1536, %v1761
        %v1763 = vpop.f32.mrb[0].mxu0
        %v1764 = vadd.f32 %v1541, %v1763
        %v1765 = vpop.f32.mrb[0].mxu0
        %v1766 = vadd.f32 %v1541, %v1765
        %1767 = vmatprep.mubr.bf16.mxu0 0
        %1768 = vmatmul.mubr.bf16.gmra.mrb[0].mxu0 %v1693
        %v1769 = vpop.f32.mrb[0].mxu0
        %v1770 = vadd.f32 %v1546, %v1769
        %v1771 = vpop.f32.mrb[0].mxu0
        %v1772 = vadd.f32 %v1546, %v1771
        %v1773 = vpop.f32.mrb[0].mxu0
        %v1774 = vadd.f32 %v1551, %v1773
        %v1775 = vpop.f32.mrb[0].mxu0
        %v1776 = vadd.f32 %v1551, %v1775
        %1777 = vmatprep.mubr.bf16.mxu0 0
        %1778 = vmatmul.mubr.bf16.gmra.mrb[0].mxu0 %v1694
        %v1779 = vpop.f32.mrb[0].mxu0
        %v1780 = vadd.f32 %v1556, %v1779
        %v1781 = vpop.f32.mrb[0].mxu0
        %v1782 = vadd.f32 %v1556, %v1781
        %v1783 = vpop.f32.mrb[0].mxu0
        %v1784 = vadd.f32 %v1561, %v1783
        %v1785 = vpop.f32.mrb[0].mxu0
        %v1786 = vadd.f32 %v1561, %v1785
        %1787 = vmatprep.mubr.bf16.mxu0 0
        %1788 = vmatmul.mubr.bf16.gmra.mrb[0].mxu0 %v1695
        %v1789 = vpop.f32.mrb[0].mxu0
        %v1790 = vadd.f32 %v1566, %v1789
        %v1791 = vpop.f32.mrb[0].mxu0
        %v1792 = vadd.f32 %v1566, %v1791
        %v1793 = vpop.f32.mrb[0].mxu0
        %v1794 = vadd.f32 %v1571, %v1793
        %v1795 = vpop.f32.mrb[0].mxu0
        %v1796 = vadd.f32 %v1571, %v1795
        %1797 = vmatprep.mubr.bf16.mxu0 0
        %1798 = vmatmul.mubr.bf16.gmra.mrb[0].mxu0 %v1696
        %v1799 = vpop.f32.mrb[0].mxu0
        %v1800 = vadd.f32 %v1576, %v1799
        %v1801 = vpop.f32.mrb[0].mxu0
        %v1802 = vadd.f32 %v1576, %v1801
        %v1803 = vpop.f32.mrb[0].mxu0
        %v1804 = vadd.f32 %v1581, %v1803
        %v1805 = vpop.f32.mrb[0].mxu0
        %v1806 = vadd.f32 %v1581, %v1805
        %1807 = vmatprep.mubr.bf16.mxu0 0
        %1808 = vmatmul.mubr.bf16.gmra.mrb[0].mxu0 %v1697
        %v1809 = vpop.f32.mrb[0].mxu0
        %v1810 = vadd.f32 %v1586, %v1809
        %v1811 = vpop.f32.mrb[0].mxu0
        %v1812 = vadd.f32 %v1586, %v1811
        %v1813 = vpop.f32.mrb[0].mxu0
        %v1814 = vadd.f32 %v1591, %v1813
        %v1815 = vpop.f32.mrb[0].mxu0
        %v1816 = vadd.f32 %v1591, %v1815
        %1817 = vmatprep.mubr.bf16.mxu0 0
        %1818 = vmatmul.mubr.bf16.gmra.mrb[0].mxu0 %v1698
        %v1819 = vpop.f32.mrb[0].mxu0
        %v1820 = vadd.f32 %v1596, %v1819
        %v1821 = vpop.f32.mrb[0].mxu0
        %v1822 = vadd.f32 %v1596, %v1821
        %v1823 = vpop.f32.mrb[0].mxu0
        %v1824 = vadd.f32 %v1601, %v1823
        %v1825 = vpop.f32.mrb[0].mxu0
        %v1826 = vadd.f32 %v1601, %v1825
        %1827 = vmatprep.mubr.bf16.mxu0 0
        %1828 = vmatmul.mubr.bf16.gmra.mrb[0].mxu0 %v1699
        %v1829 = vpop.f32.mrb[0].mxu0
        %v1830 = vadd.f32 %v1606, %v1829
        %v1831 = vpop.f32.mrb[0].mxu0
        %v1832 = vadd.f32 %v1606, %v1831
        %v1833 = vpop.f32.mrb[0].mxu0
        %v1834 = vadd.f32 %v1611, %v1833
        %v1835 = vpop.f32.mrb[0].mxu0
        %v1836 = vadd.f32 %v1611, %v1835
        %1837 = vmatprep.mubr.bf16.mxu0 0
        %1838 = vmatmul.mubr.bf16.gmra.mrb[0].mxu0 %v1700
        %v1839 = vpop.f32.mrb[0].mxu0
        %v1840 = vadd.f32 %v1616, %v1839
        %v1841 = vpop.f32.mrb[0].mxu0
        %v1842 = vadd.f32 %v1616, %v1841
        %v1843 = vpop.f32.mrb[0].mxu0
        %v1844 = vadd.f32 %v1621, %v1843
        %v1845 = vpop.f32.mrb[0].mxu0
        %v1846 = vadd.f32 %v1621, %v1845
        %1847 = vmatprep.mubr.bf16.mxu0 0
        %1848 = vmatmul.mubr.bf16.gmra.mrb[0].mxu0 %v1701
        %v1849 = vpop.f32.mrb[0].mxu0
        %v1850 = vadd.f32 %v1626, %v1849
        %v1851 = vpop.f32.mrb[0].mxu0
        %v1852 = vadd.f32 %v1626, %v1851
        %v1853 = vpop.f32.mrb[0].mxu0
        %v1854 = vadd.f32 %v1631, %v1853
        %v1855 = vpop.f32.mrb[0].mxu0
        %v1856 = vadd.f32 %v1631, %v1855
        %1857 = vmatprep.mubr.bf16.mxu0 0
        %1858 = vmatmul.mubr.bf16.gmra.mrb[0].mxu0 %v1702
        %v1859 = vpop.f32.mrb[0].mxu0
        %v1860 = vadd.f32 %v1636, %v1859
        %v1861 = vpop.f32.mrb[0].mxu0
        %v1862 = vadd.f32 %v1636, %v1861
        %v1863 = vpop.f32.mrb[0].mxu0
        %v1864 = vadd.f32 %v1641, %v1863
        %v1865 = vpop.f32.mrb[0].mxu0
        %v1866 = vadd.f32 %v1641, %v1865
        %1867 = vdwg.mxu0
        %v1868 = vmax.f32 %v1750, 0.0
        %v1869 = vmax.f32 %v1752, 0.0
        %v1870 = vmax.f32 %v1754, 0.0
        %v1871 = vmax.f32 %v1756, 0.0
        %v1872 = vmax.f32 %v1760, 0.0
        %v1873 = vmax.f32 %v1762, 0.0
        %v1874 = vmax.f32 %v1764, 0.0
        %v1875 = vmax.f32 %v1766, 0.0
        %v1876 = vmax.f32 %v1770, 0.0
        %v1877 = vmax.f32 %v1772, 0.0
        %v1878 = vmax.f32 %v1774, 0.0
        %v1879 = vmax.f32 %v1776, 0.0
        %v1880 = vmax.f32 %v1780, 0.0
        %v1881 = vmax.f32 %v1782, 0.0
        %v1882 = vmax.f32 %v1784, 0.0
        %v1883 = vmax.f32 %v1786, 0.0
        %v1884 = vmul.f32 %v1790, 0.5
        %v1885 = vmul.f32 %v1792, 0.5
        %v1886 = vmul.f32 %v1794, 0.5
        %v1887 = vmul.f32 %v1796, 0.5
        %v1888 = vmul.f32 %v1800, 0.5
        %v1889 = vmul.f32 %v1802, 0.5
        %v1890 = vmul.f32 %v1804, 0.5
        %v1891 = vmul.f32 %v1806, 0.5
        %v1892 = vmul.f32 %v1810, 0.5
        %v1893 = vmul.f32 %v1812, 0.5
        %v1894 = vmul.f32 %v1814, 0.5
        %v1895 = vmul.f32 %v1816, 0.5
        %v1896 = vmul.f32 %v1820, 0.5
        %v1897 = vmul.f32 %v1822, 0.5
        %v1898 = vmul.f32 %v1824, 0.5
        %v1899 = vmul.f32 %v1826, 0.5
        %v1900 = vtanh.pop %v1884
        %v1901 = vtanh.pop %v1885
        %v1902 = vtanh.pop %v1886
        %v1903 = vtanh.pop %v1887
        %v1904 = vtanh.pop %v1888
        %v1905 = vtanh.pop %v1889
        %v1906 = vtanh.pop %v1890
        %v1907 = vtanh.pop %v1891
        %v1908 = vtanh.pop %v1892
        %v1909 = vtanh.pop %v1893
        %v1910 = vtanh.pop %v1894
        %v1911 = vtanh.pop %v1895
        %v1912 = vtanh.pop %v1896
        %v1913 = vtanh.pop %v1897
        %v1914 = vtanh.pop %v1898
        %v1915 = vtanh.pop %v1899
        %v1916 = vmul.f32 %v1900, 0.5
        %v1917 = vmul.f32 %v1901, 0.5
        %v1918 = vmul.f32 %v1902, 0.5
        %v1919 = vmul.f32 %v1903, 0.5
        %v1920 = vmul.f32 %v1904, 0.5
        %v1921 = vmul.f32 %v1905, 0.5
        %v1922 = vmul.f32 %v1906, 0.5
        %v1923 = vmul.f32 %v1907, 0.5
        %v1924 = vmul.f32 %v1908, 0.5
        %v1925 = vmul.f32 %v1909, 0.5
        %v1926 = vmul.f32 %v1910, 0.5
        %v1927 = vmul.f32 %v1911, 0.5
        %v1928 = vmul.f32 %v1912, 0.5
        %v1929 = vmul.f32 %v1913, 0.5
        %v1930 = vmul.f32 %v1914, 0.5
        %v1931 = vmul.f32 %v1915, 0.5
        %v1932 = vadd.f32 %v1916, 0.5
        %v1933 = vadd.f32 %v1917, 0.5
        %v1934 = vadd.f32 %v1918, 0.5
        %v1935 = vadd.f32 %v1919, 0.5
        %v1936 = vadd.f32 %v1920, 0.5
        %v1937 = vadd.f32 %v1921, 0.5
        %v1938 = vadd.f32 %v1922, 0.5
        %v1939 = vadd.f32 %v1923, 0.5
        %v1940 = vadd.f32 %v1924, 0.5
        %v1941 = vadd.f32 %v1925, 0.5
        %v1942 = vadd.f32 %v1926, 0.5
        %v1943 = vadd.f32 %v1927, 0.5
        %v1944 = vadd.f32 %v1928, 0.5
        %v1945 = vadd.f32 %v1929, 0.5
        %v1946 = vadd.f32 %v1930, 0.5
        %v1947 = vadd.f32 %v1931, 0.5
        %v1948 = vmul.f32 %v1868, %v1932
        %v1949 = vmul.f32 %v1869, %v1933
        %v1950 = vmul.f32 %v1870, %v1934
        %v1951 = vmul.f32 %v1871, %v1935
        %v1952 = vmul.f32 %v1872, %v1936
        %v1953 = vmul.f32 %v1873, %v1937
        %v1954 = vmul.f32 %v1874, %v1938
        %v1955 = vmul.f32 %v1875, %v1939
        %v1956 = vmul.f32 %v1876, %v1940
        %v1957 = vmul.f32 %v1877, %v1941
        %v1958 = vmul.f32 %v1878, %v1942
        %v1959 = vmul.f32 %v1879, %v1943
        %v1960 = vmul.f32 %v1880, %v1944
        %v1961 = vmul.f32 %v1881, %v1945
        %v1962 = vmul.f32 %v1882, %v1946
        %v1963 = vmul.f32 %v1883, %v1947
        %v1964 = vadd.f32 %v1948, %v1830
        %v1965 = vadd.f32 %v1949, %v1832
        %v1966 = vadd.f32 %v1950, %v1834
        %v1967 = vadd.f32 %v1951, %v1836
        %v1968 = vadd.f32 %v1952, %v1840
        %v1969 = vadd.f32 %v1953, %v1842
        %v1970 = vadd.f32 %v1954, %v1844
        %v1971 = vadd.f32 %v1955, %v1846
        %v1972 = vadd.f32 %v1956, %v1850
        %v1973 = vadd.f32 %v1957, %v1852
        %v1974 = vadd.f32 %v1958, %v1854
        %v1975 = vadd.f32 %v1959, %v1856
        %v1976 = vadd.f32 %v1960, %v1860
        %v1977 = vadd.f32 %v1961, %v1862
        %v1978 = vadd.f32 %v1962, %v1864
        %v1979 = vadd.f32 %v1963, %v1866
        %v1980 = vld [vmem:[%s5] sm:$0xf]
        %v1981 = vld [vmem:[%s5 + $0x4] sm:$0xf]
        %v1982 = vld [vmem:[%s5 + $0x8] sm:$0xf]
        %v1983 = vld [vmem:[%s5 + $0xc] sm:$0xf]
        %v1984 = vld [vmem:[%s5 + $0x10] sm:$0xf]
        %v1985 = vld [vmem:[%s5 + $0x14] sm:$0xf]
        %v1986 = vld [vmem:[%s5 + $0x18] sm:$0xf]
        %v1987 = vld [vmem:[%s5 + $0x1c] sm:$0xf]
        %v1988 = vld [vmem:[%s5 + $0x20] sm:$0xf]
        %v1989 = vld [vmem:[%s5 + $0x24] sm:$0xf]
        %v1990 = vld [vmem:[%s5 + $0x28] sm:$0xf]
        %v1991 = vld [vmem:[%s5 + $0x2c] sm:$0xf]
        %v1992 = vpack.c.bf16 %v1966, %v1964
        %v1993 = vpack.c.bf16 %v1967, %v1965
        %v1994 = vpack.c.bf16 %v1970, %v1968
        %v1995 = vpack.c.bf16 %v1971, %v1969
        %v1996 = vpack.c.bf16 %v1974, %v1972
        %v1997 = vpack.c.bf16 %v1975, %v1973
        %v1998 = vpack.c.bf16 %v1978, %v1976
        %v1999 = vpack.c.bf16 %v1979, %v1977
        %v2000 = vld [vmem:[%s6] sm:$0xff]
        %v2001 = vld [vmem:[%s6 + $0x8] sm:$0xff]
        %v2002 = vld [vmem:[%s6 + $0x10] sm:$0xff]
        %v2003 = vld [vmem:[%s6 + $0x18] sm:$0xff]
        %v2004 = vld [vmem:[%s6 + $0x20] sm:$0xff]
        %v2005 = vld [vmem:[%s6 + $0x28] sm:$0xff]
        %v2006 = vld [vmem:[%s6 + $0x30] sm:$0xff]
        %v2007 = vld [vmem:[%s6 + $0x38] sm:$0xff]
        %v2008 = vld [vmem:[%s6 + $0x40] sm:$0xff]
        %v2009 = vld [vmem:[%s6 + $0x48] sm:$0xff]
        %v2010 = vld [vmem:[%s6 + $0x50] sm:$0xff]
        %v2011 = vld [vmem:[%s6 + $0x58] sm:$0xff]
        %2013 = vset.pattern.permute.xlu0 0
        %2014 = vperm.xlu0 %2013, %v2000
        %v2015 = vpop.permute.xlu0 %2014
        %2018 = vset.pattern.permute.xlu0 0
        %2019 = vperm.xlu0 %2018, %v2001
        %v2020 = vpop.permute.xlu0 %2019
        %2023 = vset.pattern.permute.xlu0 0
        %2024 = vperm.xlu0 %2023, %v2002
        %v2025 = vpop.permute.xlu0 %2024
        %2028 = vset.pattern.permute.xlu0 0
        %2029 = vperm.xlu0 %2028, %v2003
        %v2030 = vpop.permute.xlu0 %2029
        %2033 = vset.pattern.permute.xlu0 0
        %2034 = vperm.xlu0 %2033, %v2004
        %v2035 = vpop.permute.xlu0 %2034
        %2038 = vset.pattern.permute.xlu0 0
        %2039 = vperm.xlu0 %2038, %v2005
        %v2040 = vpop.permute.xlu0 %2039
        %2043 = vset.pattern.permute.xlu0 0
        %2044 = vperm.xlu0 %2043, %v2006
        %v2045 = vpop.permute.xlu0 %2044
        %2048 = vset.pattern.permute.xlu0 0
        %2049 = vperm.xlu0 %2048, %v2007
        %v2050 = vpop.permute.xlu0 %2049
        %2053 = vset.pattern.permute.xlu0 0
        %2054 = vperm.xlu0 %2053, %v2008
        %v2055 = vpop.permute.xlu0 %2054
        %2058 = vset.pattern.permute.xlu0 0
        %2059 = vperm.xlu0 %2058, %v2009
        %v2060 = vpop.permute.xlu0 %2059
        %2063 = vset.pattern.permute.xlu0 0
        %2064 = vperm.xlu0 %2063, %v2010
        %v2065 = vpop.permute.xlu0 %2064
        %2068 = vset.pattern.permute.xlu0 0
        %2069 = vperm.xlu0 %2068, %v2011
        %v2070 = vpop.permute.xlu0 %2069
        %v2084 = vunpack.c.l.b16 %v1980
        %v2085 = vunpack.c.l.b16 %v1981
        %v2086 = vunpack.c.l.b16 %v1982
        %v2087 = vunpack.c.l.b16 %v1983
        %v2088 = vunpack.c.l.b16 %v1984
        %v2089 = vunpack.c.l.b16 %v1985
        %v2090 = vunpack.c.l.b16 %v1986
        %v2091 = vunpack.c.l.b16 %v1987
        %v2092 = vunpack.c.l.b16 %v1988
        %v2093 = vunpack.c.l.b16 %v1989
        %v2094 = vunpack.c.l.b16 %v1990
        %v2095 = vunpack.c.l.b16 %v1991
        %v2096 = vpack.c.b16 %v2085, %v2084
        %v2097 = vpack.c.b16 %v2087, %v2086
        %v2098 = vpack.c.b16 %v2089, %v2088
        %v2099 = vpack.c.b16 %v2091, %v2090
        %v2100 = vpack.c.b16 %v2093, %v2092
        %v2101 = vpack.c.b16 %v2095, %v2094
        %vm2102 = vcmask 523264
        %v2104 = vsel %vm2102, %v2096, 0
        %v2107 = vsel %vm2102, %v2097, 0
        %v2110 = vsel %vm2102, %v2098, 0
        %v2113 = vsel %vm2102, %v2099, 0
        %v2116 = vsel %vm2102, %v2100, 0
        %v2119 = vsel %vm2102, %v2101, 0
        %2121 = vmatprep.subr.bf16.mxu0 %v1993
        %2122 = vmatpush1.bf16.msra.mxu0 %v1992
        %2123 = vmatprep.subr.bf16.mxu0 %v1995
        %2124 = vmatpush1.bf16.msra.mxu0 %v1994
        %2125 = vmatprep.subr.bf16.mxu0 %v1997
        %2126 = vmatpush1.bf16.msra.mxu0 %v1996
        %2127 = vmatprep.subr.bf16.mxu0 %v1999
        %2128 = vmatpush1.bf16.msra.mxu0 %v1998
        %2129 = vmatprep.subr.bf16.mxu0 0
        %2130 = vmatpush1.bf16.msra.mxu0 0
        %2131 = vmatprep.subr.bf16.mxu0 0
        %2132 = vmatpush1.bf16.msra.mxu0 0
        %2133 = vmatprep.subr.bf16.mxu0 0
        %2134 = vmatpush1.bf16.msra.mxu0 0
        %2135 = vmatprep.subr.bf16.mxu0 0
        %2136 = vmatpush1.bf16.msra.mxu0 0
        %2137 = vmatprep.subr.bf16.mxu0 0
        %2138 = vmatpush1.bf16.msra.mxu0 0
        %2139 = vmatprep.subr.bf16.mxu0 0
        %2140 = vmatpush1.bf16.msra.mxu0 0
        %2141 = vmatprep.subr.bf16.mxu0 0
        %2142 = vmatpush1.bf16.msra.mxu0 0
        %2143 = vmatprep.subr.bf16.mxu0 0
        %2144 = vmatpush1.bf16.msra.mxu0 0
        %2145 = vmatprep.subr.bf16.mxu0 0
        %2146 = vmatpush1.bf16.msra.mxu0 0
        %2147 = vmatprep.subr.bf16.mxu0 0
        %2148 = vmatpush1.bf16.msra.mxu0 0
        %2149 = vmatprep.subr.bf16.mxu0 0
        %2150 = vmatpush1.bf16.msra.mxu0 0
        %2151 = vmatprep.subr.bf16.mxu0 0
        %2152 = vmatpush1.bf16.msra.mxu0 0
        %2153 = vmatprep.mubr.bf16.mxu0 0
        %2154 = vmatmul.mubr.bf16.gmra.mrb[0].mxu0 %v2104
        %v2155 = vpop.f32.mrb[0].mxu0
        %v2156 = vadd.f32 %v2015, %v2155
        %v2157 = vpop.f32.mrb[0].mxu0
        %v2158 = vadd.f32 %v2015, %v2157
        %v2159 = vpop.f32.mrb[0].mxu0
        %v2160 = vadd.f32 %v2020, %v2159
        %v2161 = vpop.f32.mrb[0].mxu0
        %v2162 = vadd.f32 %v2020, %v2161
        %2163 = vmatprep.mubr.bf16.mxu0 0
        %2164 = vmatmul.mubr.bf16.gmra.mrb[0].mxu0 %v2107
        %v2165 = vpop.f32.mrb[0].mxu0
        %v2166 = vadd.f32 %v2025, %v2165
        %v2167 = vpop.f32.mrb[0].mxu0
        %v2168 = vadd.f32 %v2025, %v2167
        %v2169 = vpop.f32.mrb[0].mxu0
        %v2170 = vadd.f32 %v2030, %v2169
        %v2171 = vpop.f32.mrb[0].mxu0
        %v2172 = vadd.f32 %v2030, %v2171
        %2173 = vmatprep.mubr.bf16.mxu0 0
        %2174 = vmatmul.mubr.bf16.gmra.mrb[0].mxu0 %v2110
        %v2175 = vpop.f32.mrb[0].mxu0
        %v2176 = vadd.f32 %v2035, %v2175
        %v2177 = vpop.f32.mrb[0].mxu0
        %v2178 = vadd.f32 %v2035, %v2177
        %v2179 = vpop.f32.mrb[0].mxu0
        %v2180 = vadd.f32 %v2040, %v2179
        %v2181 = vpop.f32.mrb[0].mxu0
        %v2182 = vadd.f32 %v2040, %v2181
        %2183 = vmatprep.mubr.bf16.mxu0 0
        %2184 = vmatmul.mubr.bf16.gmra.mrb[0].mxu0 %v2113
        %v2185 = vpop.f32.mrb[0].mxu0
        %v2186 = vadd.f32 %v2045, %v2185
        %v2187 = vpop.f32.mrb[0].mxu0
        %v2188 = vadd.f32 %v2045, %v2187
        %v2189 = vpop.f32.mrb[0].mxu0
        %v2190 = vadd.f32 %v2050, %v2189
        %v2191 = vpop.f32.mrb[0].mxu0
        %v2192 = vadd.f32 %v2050, %v2191
        %2193 = vmatprep.mubr.bf16.mxu0 0
        %2194 = vmatmul.mubr.bf16.gmra.mrb[0].mxu0 %v2116
        %v2195 = vpop.f32.mrb[0].mxu0
        %v2196 = vadd.f32 %v2055, %v2195
        %v2197 = vpop.f32.mrb[0].mxu0
        %v2198 = vadd.f32 %v2055, %v2197
        %v2199 = vpop.f32.mrb[0].mxu0
        %v2200 = vadd.f32 %v2060, %v2199
        %v2201 = vpop.f32.mrb[0].mxu0
        %v2202 = vadd.f32 %v2060, %v2201
        %2203 = vmatprep.mubr.bf16.mxu0 0
        %2204 = vmatmul.mubr.bf16.gmra.mrb[0].mxu0 %v2119
        %v2205 = vpop.f32.mrb[0].mxu0
        %v2206 = vadd.f32 %v2065, %v2205
        %v2207 = vpop.f32.mrb[0].mxu0
        %v2208 = vadd.f32 %v2065, %v2207
        %v2209 = vpop.f32.mrb[0].mxu0
        %v2210 = vadd.f32 %v2070, %v2209
        %v2211 = vpop.f32.mrb[0].mxu0
        %v2212 = vadd.f32 %v2070, %v2211
        %2213 = vdwg.mxu0
        %v2214 = vmax.f32 %v2156, 0.0
        %v2215 = vmax.f32 %v2158, 0.0
        %v2216 = vmax.f32 %v2160, 0.0
        %v2217 = vmax.f32 %v2162, 0.0
        %v2218 = vmax.f32 %v2166, 0.0
        %v2219 = vmax.f32 %v2168, 0.0
        %v2220 = vmax.f32 %v2170, 0.0
        %v2221 = vmax.f32 %v2172, 0.0
        %v2222 = vmul.f32 %v2176, 0.5
        %v2223 = vmul.f32 %v2178, 0.5
        %v2224 = vmul.f32 %v2180, 0.5
        %v2225 = vmul.f32 %v2182, 0.5
        %v2226 = vmul.f32 %v2186, 0.5
        %v2227 = vmul.f32 %v2188, 0.5
        %v2228 = vmul.f32 %v2190, 0.5
        %v2229 = vmul.f32 %v2192, 0.5
        %v2230 = vtanh.pop %v2222
        %v2231 = vtanh.pop %v2223
        %v2232 = vtanh.pop %v2224
        %v2233 = vtanh.pop %v2225
        %v2234 = vtanh.pop %v2226
        %v2235 = vtanh.pop %v2227
        %v2236 = vtanh.pop %v2228
        %v2237 = vtanh.pop %v2229
        %v2238 = vmul.f32 %v2230, 0.5
        %v2239 = vmul.f32 %v2231, 0.5
        %v2240 = vmul.f32 %v2232, 0.5
        %v2241 = vmul.f32 %v2233, 0.5
        %v2242 = vmul.f32 %v2234, 0.5
        %v2243 = vmul.f32 %v2235, 0.5
        %v2244 = vmul.f32 %v2236, 0.5
        %v2245 = vmul.f32 %v2237, 0.5
        %v2246 = vadd.f32 %v2238, 0.5
        %v2247 = vadd.f32 %v2239, 0.5
        %v2248 = vadd.f32 %v2240, 0.5
        %v2249 = vadd.f32 %v2241, 0.5
        %v2250 = vadd.f32 %v2242, 0.5
        %v2251 = vadd.f32 %v2243, 0.5
        %v2252 = vadd.f32 %v2244, 0.5
        %v2253 = vadd.f32 %v2245, 0.5
        %v2254 = vmul.f32 %v2214, %v2246
        %v2255 = vmul.f32 %v2215, %v2247
        %v2256 = vmul.f32 %v2216, %v2248
        %v2257 = vmul.f32 %v2217, %v2249
        %v2258 = vmul.f32 %v2218, %v2250
        %v2259 = vmul.f32 %v2219, %v2251
        %v2260 = vmul.f32 %v2220, %v2252
        %v2261 = vmul.f32 %v2221, %v2253
        %v2262 = vadd.f32 %v2254, %v2196
        %v2263 = vadd.f32 %v2255, %v2198
        %v2264 = vadd.f32 %v2256, %v2200
        %v2265 = vadd.f32 %v2257, %v2202
        %v2266 = vadd.f32 %v2258, %v2206
        %v2267 = vadd.f32 %v2259, %v2208
        %v2268 = vadd.f32 %v2260, %v2210
        %v2269 = vadd.f32 %v2261, %v2212
        %v2270 = vld [vmem:[%s7] sm:$0x1]
        %v2271 = vpack.c.bf16 %v2264, %v2262
        %v2272 = vpack.c.bf16 %v2265, %v2263
        %v2273 = vpack.c.bf16 %v2268, %v2266
        %v2274 = vpack.c.bf16 %v2269, %v2267
        %v2275 = vld [vmem:[#allocation2] sm:$0x1]
        %2277 = vset.pattern.permute.xlu0 0
        %2278 = vperm.xlu0 %2277, %v2275
        %v2279 = vpop.permute.xlu0 %2278
        %v2281 = vlaneseq
        %v2282 = vshrl.u32 %v2281, 7
        %v2283 = vsub.s32 0, %v2282
        %v2284 = vrot.slane %v2279, %v2283
        %vm2285 = vcmask 261120
        %v2287 = vsel %vm2285, %v2270, 0
        %2289 = vmatprep.subr.bf16.mxu0 %v2272
        %2290 = vmatpush1.bf16.msra.mxu0 %v2271
        %2291 = vmatprep.subr.bf16.mxu0 %v2274
        %2292 = vmatpush1.bf16.msra.mxu0 %v2273
        %2293 = vmatprep.subr.bf16.mxu0 0
        %2294 = vmatpush1.bf16.msra.mxu0 0
        %2295 = vmatprep.subr.bf16.mxu0 0
        %2296 = vmatpush1.bf16.msra.mxu0 0
        %2297 = vmatprep.subr.bf16.mxu0 0
        %2298 = vmatpush1.bf16.msra.mxu0 0
        %2299 = vmatprep.subr.bf16.mxu0 0
        %2300 = vmatpush1.bf16.msra.mxu0 0
        %2301 = vmatprep.subr.bf16.mxu0 0
        %2302 = vmatpush1.bf16.msra.mxu0 0
        %2303 = vmatprep.subr.bf16.mxu0 0
        %2304 = vmatpush1.bf16.msra.mxu0 0
        %2305 = vmatprep.subr.bf16.mxu0 0
        %2306 = vmatpush1.bf16.msra.mxu0 0
        %2307 = vmatprep.subr.bf16.mxu0 0
        %2308 = vmatpush1.bf16.msra.mxu0 0
        %2309 = vmatprep.subr.bf16.mxu0 0
        %2310 = vmatpush1.bf16.msra.mxu0 0
        %2311 = vmatprep.subr.bf16.mxu0 0
        %2312 = vmatpush1.bf16.msra.mxu0 0
        %2313 = vmatprep.subr.bf16.mxu0 0
        %2314 = vmatpush1.bf16.msra.mxu0 0
        %2315 = vmatprep.subr.bf16.mxu0 0
        %2316 = vmatpush1.bf16.msra.mxu0 0
        %2317 = vmatprep.subr.bf16.mxu0 0
        %2318 = vmatpush1.bf16.msra.mxu0 0
        %2319 = vmatprep.subr.bf16.mxu0 0
        %2320 = vmatpush1.bf16.msra.mxu0 0
        %2321 = vmatprep.mubr.bf16.mxu0 0
        %2322 = vmatmul.mubr.bf16.gmra.mrb[0].mxu0 %v2287
        %v2323 = vpop.f32.mrb[0].mxu0
        %v2324 = vadd.f32 %v2284, %v2323
        %v2325 = vpop.f32.mrb[0].mxu0
        %v2326 = vadd.f32 %v2284, %v2325
        %v2327 = vpop.f32.mrb[0].mxu0
        %v2328 = vpop.f32.mrb[0].mxu0
        %2329 = vdwg.mxu0
        %v2332 = vcombine.low %v2324, %v2326
        %v2334 = vunpack.c.l.s4 1966171168
        %v2335 = vunpack.c.0.s8 %v2334
        %v2336 = vlaneseq
        %v2337 = vshrl.u32 %v2336, 7
        %v2338 = vsub.s32 %v2335, %v2337
        %v2339 = vrot.slane %v2332, %v2338
        %v2341 = vunpack.c.l.s4 1966171168
        %v2342 = vunpack.c.0.s8 %v2341
        %v2343 = vlaneseq
        %v2344 = vshrl.u32 %v2343, 7
        %v2345 = vsub.s32 %v2342, %v2344
        %v2346 = vrot.slane %v2339, %v2345
        %v2348 = vlaneseq
        %vm2349 = vcmp.ge.s32.totalorder %v2348, 0
        %vm2350 = vcmp.lt.s32.totalorder %v2348, 256
        %vm2351 = vmand %vm2349, %vm2350
        %2352 = vst.msk [vmem:[%s328] sm:$0x3] %vm2351, %v2346
        %s2353 = sand.u32 %s227, 1
        %s2354 = scalar_lea.sflag [#allocation4], %s2353
        %s2355 = sand.u32 %s227, 1
        %s2356 = smul.addr %s2355, 2
        %s2357 = scalar_lea.vmem [#allocation3], %s2356
        // Predicated region
        $region57: #{tpu_custom_call.1} parent=55 // pred_check
          %p2358 = pneg %p237
        $region58: #{tpu_custom_call.1} parent=55 // pred_check_branch
          %2360 = sbr.rel (%p2358) target = $region60
        $region59: #{tpu_custom_call.1} parent=55 // pred_region
          %s2361 = smul.u32 2, %s25
          %s2363 = ssub.s32 32, 32
          %2364 = vsyncadd %s2354, %s2363
          %s2365 = smul.addr %s2361, 16
          %s2366 = scalar_lea.hbm %s9, %s2365
          %s2368 = sshll.u32 %s2357, 4
          %s2369 = int_to_ptr.vmem [resolvable:$true] %s2368
          %2371 = dma.vmem_to_hbm [thread:$0]  %s2369, 32, %s2366, %s2354
        $region60: #{tpu_custom_call.1} parent=55 // pred_fallthru
          _
      $region56: #{tpu_custom_call.1} parent=5 // pred_fallthru
        _
      %p2372 = scmp.le.s32.totalorder 2, %s20
      // Predicated region
      $region61: #{tpu_custom_call.1} parent=5 // pred_check
        %p2373 = pneg %p2372
      $region62: #{tpu_custom_call.1} parent=5 // pred_check_branch
        %2375 = sbr.rel (%p2373) target = $region64
      $region63: #{tpu_custom_call.1} parent=5 // pred_region
        %s2376 = ssub.s32 %s20, 2
        // Predicated region
        $region65: #{tpu_custom_call.1} parent=63 // pred_check
          %p2377 = pneg %p243
        $region66: #{tpu_custom_call.1} parent=63 // pred_check_branch
          %2379 = sbr.rel (%p2377) target = $region68
        $region67: #{tpu_custom_call.1} parent=63 // pred_region
          %s2380 = sand.u32 %s228, 1
          %s2381 = scalar_lea.sflag [#allocation4], %s2380
          %s2382 = sand.u32 %s228, 1
          %s2383 = smul.addr %s2382, 2
          %s2384 = scalar_lea.vmem [#allocation3], %s2383
          %2385 = dma.done %s2381, 32
        $region68: #{tpu_custom_call.1} parent=63 // pred_fallthru
          _
      $region64: #{tpu_custom_call.1} parent=5 // pred_fallthru
        _
    $region6: #{tpu_custom_call.1} parent=1 // loop_footer
      %s24 = sadd.s32 1, %s20
    $region7: #{tpu_custom_call.1} parent=1 // loop_footer_branch
      %19 = sbr.rel target = $region3
    $region8: #{tpu_custom_call.1} parent=1 // loop_exit
      _
    %2386 = vsyncpa [#allocation4], 1
    %s2387 = scalar_lea.sflag [#allocation4], 1
    %2388 = vsyncpa %s2387, 1

</llo_original>
